<compile_context>
chip_gen: v7x
topology: tpu7x:2x2x1
jax: 0.10.0
libtpu: 0.0.40
codegen_flags: <defaults>
</compile_context>

<pallas_src>
import functools
import math

import jax
import jax.numpy as jnp
from jax import lax
from jax.experimental import pallas as pl
from jax.experimental.pallas import tpu as pltpu


def _round_up(v, m):
    return -(-v // m) * m


# ----------------------------------------------------------------------------
# Pallas kernel
# ----------------------------------------------------------------------------
def _axial_kernel(xm_ref, xt_ref, xb_ref, whm_ref, wv_ref, b_ref,
                  wpw_ref, bpw_ref, o_ref, *, H, TH, W, K):
    """Fused axial depthwise conv + residual + ReLU + 1x1 conv for one row block.

    xm_ref : (1, TH, W, C)   image rows [i*TH, i*TH+TH)          (NHWC, unpadded)
    xt_ref : (1, P,  W, C)   halo rows  [i*TH-P, i*TH)           (clamped fetch)
    xb_ref : (1, P,  W, C)   halo rows  [i*TH+TH, i*TH+TH+P)     (clamped fetch)
    whm_ref: (K, W, C) f32   horizontal taps, border-masked, residual folded in
    wv_ref : (K, C)    f32   vertical taps
    b_ref  : (1, C)    f32   fused b_h + b_v
    wpw_ref: (C, Cout) bf16  1x1-conv weight
    bpw_ref: (1, Cout) f32   1x1-conv bias
    o_ref  : (1, Cout, TH*W) lane-dense NCHW output block
    """
    P = K // 2
    r0 = pl.program_id(1) * TH

    xm = xm_ref[0].astype(jnp.float32)                         # (TH, W, C)

    # --- zero-padding semantics at the image borders (no padded HBM copy) ---
    if H % TH != 0:  # partial last row block: zero the rows past the image
        rows = r0 + lax.broadcasted_iota(jnp.int32, (TH, 1, 1), 0)
        xm = jnp.where(rows < H, xm, 0.0)
    head_rows = r0 - P + lax.broadcasted_iota(jnp.int32, (P, 1, 1), 0)
    head = jnp.where(head_rows >= 0, xt_ref[0].astype(jnp.float32), 0.0)
    tail_rows = r0 + TH + lax.broadcasted_iota(jnp.int32, (P, 1, 1), 0)
    tail = jnp.where(tail_rows < H, xb_ref[0].astype(jnp.float32), 0.0)

    whm = whm_ref[...]                                          # (K, W, C)
    wv = wv_ref[...]                                            # (K, C)

    # --- horizontal taps (identity residual folded into the center tap) ---
    # Only the TH main rows are rolled; wrap-around columns are zeroed via the
    # pre-masked weights, so no per-tap where/select is needed.
    acc = whm[P] * xm
    for k in range(K):
        if k != P:
            acc = acc + whm[k] * pltpu.roll(xm, (W - (k - P)) % W, axis=1)

    # --- vertical taps: free leading-axis slices of the row slab ---
    slab = jnp.concatenate([head, xm, tail], axis=0)            # (TH + 2P, W, C)
    for k in range(K):
        acc = acc + wv[k] * slab[k:k + TH]

    # --- fused bias, ReLU, 1x1 conv (MXU, bf16 operands, f32 accumulation) ---
    t = jnp.maximum(acc + b_ref[...], 0.0)                      # (TH, W, C)
    C = t.shape[-1]
    y = jnp.dot(t.reshape(TH * W, C).astype(jnp.bfloat16), wpw_ref[...],
                preferred_element_type=jnp.float32)             # (TH*W, Cout)
    y = y + bpw_ref[...]
    # Transpose the (small) result so the store and the HBM layout are
    # lane-dense along H*W and already in NCHW order (no wrapper transpose).
    o_ref[...] = y.astype(o_ref.dtype).T[None]                  # (1, Cout, TH*W)


# ----------------------------------------------------------------------------
# Sizing helpers
# ----------------------------------------------------------------------------
def _vmem_limits():
    """Return (working-set budget for row-block sizing, compiler VMEM limit)."""
    try:
        cap = int(pltpu.get_tpu_info().vmem_capacity_bytes)
    except Exception:                     # no TPU visible / older API
        cap = 64 * 1024 * 1024            # conservative (v7x-sized VMEM)
    limit = min(cap * 3 // 4, 100 * 1024 * 1024)   # ~96 MiB v5e/v6e, 48 MiB v7x
    return limit * 2 // 3, limit


def _choose_row_block(N, H, W, C, Cout, itemsize, P, budget):
    """Largest legal row block whose VMEM working set (double-buffered IO +
    live f32 slabs, lane padding included) fits `budget`, aligned for the halo
    blocks (TH % P == 0) and the lane-dense output tile (TH*W % 128 == 0),
    then rebalanced to minimize last-block waste."""
    Wp, Cp = _round_up(W, 8), _round_up(C, 128)
    per_row = (
        2 * Wp * Cp * itemsize                      # main input block, double buffered
        + 2 * _round_up(Cout, 8) * W * itemsize     # lane-dense output, double buffered
        + 5 * Wp * Cp * 4                           # live f32 slabs (slab/acc/tap/t)
        + W * (2 * Cp + 4 * _round_up(Cout, 128) + 4 * _round_up(Cout, 8))
    )
    th = max(P, min(int(budget // max(per_row, 1)), 1024))
    if th >= H:
        return H                                    # one block per image: always legal
    lane_g = 128 // math.gcd(128, W)
    g = P * lane_g // math.gcd(P, lane_g)           # lcm(P, 128/gcd(128, W))
    if g >= H:
        return H
    if th < g:
        return min(g, H)
    th = (th // g) * g
    nb = -(-H // th)
    # v7x: the 2 TensorCores split the grid; prefer an even step count when the
    # batch dimension is odd.
    if N % 2 == 1 and nb % 2 == 1 and nb + 1 <= -(-H // g):
        nb += 1
    th = g * (-(-H // (nb * g)))                    # rebalance: overshoot < g
    return max(g, min(th, H))


# ----------------------------------------------------------------------------
# Wrapper
# ----------------------------------------------------------------------------
def axial_depthwise_conv(x_nchw, params, kernel_length=5, row_block=None):
    """AxialDepthwiseConv.forward.  x_nchw: (N, C, H, W) as in PyTorch."""
    K = int(kernel_length)
    assert K % 2 == 1 and K >= 3, "odd kernel_length >= 3 expected"
    P = K // 2
    N, C, H, W = x_nchw.shape
    Cout = params["w_pw"].shape[1]

    # Channels-last so per-channel depthwise weights broadcast over lanes and
    # the 1x1 conv contracts the lane dim.  The kernel emits NCHW directly, so
    # there is no output transpose; in a channels-last model this input
    # transpose disappears as well.
    x = jnp.transpose(x_nchw, (0, 2, 3, 1))

    budget, vmem_limit = _vmem_limits()
    TH = int(row_block) if row_block else _choose_row_block(
        N, H, W, C, Cout, x.dtype.itemsize, P, budget)
    TH = max(1, min(TH, H))
    assert TH == H or (TH % P == 0 and (TH * W) % 128 == 0), (
        "row_block must equal H, or be a multiple of kernel_length//2 with "
        "row_block*W a multiple of 128")
    nb = -(-H // TH)
    thp = TH // P if P else 1       # halo-block granularity (used when nb > 1)
    n_hblk = -(-H // P)

    # Horizontal taps pre-masked against the image border (roll wrap-around
    # columns contribute zero), identity residual folded into the center tap,
    # and both depthwise biases fused into a single vector.
    wf = params["w_h"].astype(jnp.float32)
    col = jnp.arange(W)[None, :, None]                    # (1, W, 1)
    off = (jnp.arange(K) - P)[:, None, None]              # (K, 1, 1)
    inside = (col + off >= 0) & (col + off < W)           # (K, W, 1)
    whm = jnp.where(inside, wf[:, None, :], 0.0)          # (K, W, C)
    whm = whm.at[P].add(1.0)                              # + identity residual
    wv = params["w_v"].astype(jnp.float32)
    b_hv = (params["b_h"] + params["b_v"]).astype(jnp.float32).reshape(1, C)
    wpw = params["w_pw"].astype(jnp.bfloat16)             # MXU-native operand
    bpw = params["b_pw"].astype(jnp.float32).reshape(1, Cout)

    out_flat = pl.pallas_call(
        functools.partial(_axial_kernel, H=H, TH=TH, W=W, K=K),
        out_shape=jax.ShapeDtypeStruct((N, Cout, H * W), x.dtype),
        grid=(N, nb),
        in_specs=[
            # main row block: rows [i*TH, i*TH + TH)
            pl.BlockSpec((1, TH, W, C), lambda n, i: (n, i, 0, 0)),
            # P-row halo above (clamped at the top edge; masked in-kernel)
            pl.BlockSpec((1, P, W, C),
                         lambda n, i: (n, jnp.maximum(i * thp - 1, 0), 0, 0)),
            # P-row halo below (clamped at the bottom edge; masked in-kernel)
            pl.BlockSpec((1, P, W, C),
                         lambda n, i: (n, jnp.minimum((i + 1) * thp, n_hblk - 1), 0, 0)),
            pl.BlockSpec((K, W, C), lambda n, i: (0, 0, 0)),
            pl.BlockSpec((K, C), lambda n, i: (0, 0)),
            pl.BlockSpec((1, C), lambda n, i: (0, 0)),
            pl.BlockSpec((C, Cout), lambda n, i: (0, 0)),
            pl.BlockSpec((1, Cout), lambda n, i: (0, 0)),
        ],
        # Lane-dense NCHW output: the last dim is the flattened H*W plane.
        out_specs=pl.BlockSpec((1, Cout, TH * W), lambda n, i: (n, 0, i)),
        compiler_params=pltpu.CompilerParams(
            dimension_semantics=("parallel", "parallel"),
            vmem_limit_bytes=vmem_limit,
        ),
    )(x, x, x, whm, wv, b_hv, wpw, bpw)

    return out_flat.reshape(N, Cout, H, W)                # free reshape, already NCHW


# ----------------------------------------------------------------------------
# Pure-JAX reference (for correctness verification only)
# ----------------------------------------------------------------------------
def axial_depthwise_conv_reference(x_nchw, params, kernel_length=5):
    K = kernel_length
    P = K // 2
    x = jnp.transpose(x_nchw, (0, 2, 3, 1))
    N, H, W, C = x.shape
    xp = jnp.pad(x, ((0, 0), (P, P), (P, P), (0, 0)))
    h = sum(params["w_h"][k] * xp[:, P:P + H, k:k + W, :] for k in range(K)) + params["b_h"]
    v = sum(params["w_v"][k] * xp[:, k:k + H, P:P + W, :] for k in range(K)) + params["b_v"]
    t = jnp.maximum(h + v + x, 0.0)
    y = jnp.einsum("nhwc,co->nhwo", t, params["w_pw"]) + params["b_pw"]
    return jnp.transpose(y, (0, 3, 1, 2))


# ----------------------------------------------------------------------------
# Deterministic parameter init (shapes mirror the torch module's used layers)
# ----------------------------------------------------------------------------
def init_axial_params(key, in_channels, out_channels, kernel_length=5, scale=0.1):
    ks = jax.random.split(key, 6)
    return dict(
        w_h=jax.random.normal(ks[0], (kernel_length, in_channels), jnp.float32) * scale,
        b_h=jax.random.normal(ks[1], (in_channels,), jnp.float32) * scale,
        w_v=jax.random.normal(ks[2], (kernel_length, in_channels), jnp.float32) * scale,
        b_v=jax.random.normal(ks[3], (in_channels,), jnp.float32) * scale,
        w_pw=jax.random.normal(ks[4], (in_channels, out_channels), jnp.float32) * scale,
        b_pw=jax.random.normal(ks[5], (out_channels,), jnp.float32) * scale,
    )


# ----------------------------------------------------------------------------
if __name__ == "__main__":
    key = jax.random.PRNGKey(0)
    k_params, k_x, k_x2 = jax.random.split(key, 3)

    # Shapes consistent with the PyTorch module (NCHW input), kept small.
    N, C, H, W, COUT = 2, 4, 16, 16, 8
    params = init_axial_params(k_params, C, COUT)
    x = jax.random.normal(k_x, (N, C, H, W), jnp.float32)

    out = jax.block_until_ready(axial_depthwise_conv(x, params))
    assert out.shape == (N, COUT, H, W), out.shape
    ref = axial_depthwise_conv_reference(x, params)
    err = float(jnp.max(jnp.abs(out - ref)))
    # bf16 MXU operands for the 1x1 conv (per perf guidance) -> loosened tolerance.
    assert err < 5e-2, f"max abs error vs reference: {err}"

    # Second case: multiple row blocks, halo fetches, and a partial last block
    # (H not a multiple of the row block) to exercise the border masking.
    N2, H2, W2 = 1, 20, 16
    x2 = jax.random.normal(k_x2, (N2, C, H2, W2), jnp.float32)
    out2 = jax.block_until_ready(axial_depthwise_conv(x2, params, row_block=8))
    ref2 = axial_depthwise_conv_reference(x2, params)
    err2 = float(jnp.max(jnp.abs(out2 - ref2)))
    assert err2 < 5e-2, f"max abs error vs reference (tiled): {err2}"

    print("KERNEL_OK")
</pallas_src>

<mosaic_0001>
module attributes {stable_mosaic.version = 11 : i64} {
  func.func @_axial_kernel(%arg0: i32, %arg1: i32, %arg2: memref<1x16x16x4xf32, #tpu.memory_space<vmem>>, %arg3: memref<1x2x16x4xf32, #tpu.memory_space<vmem>>, %arg4: memref<1x2x16x4xf32, #tpu.memory_space<vmem>>, %arg5: memref<5x16x4xf32, #tpu.memory_space<vmem>>, %arg6: memref<5x4xf32, #tpu.memory_space<vmem>>, %arg7: memref<1x4xf32, #tpu.memory_space<vmem>>, %arg8: memref<4x8xbf16, #tpu.memory_space<vmem>>, %arg9: memref<1x8xf32, #tpu.memory_space<vmem>>, %arg10: memref<1x8x256xf32, #tpu.memory_space<vmem>>) attributes {dimension_semantics = [#tpu.dimension_semantics<parallel>, #tpu.dimension_semantics<parallel>], iteration_bounds = array<i64: 2, 1>, scalar_prefetch = 0 : i64, scratch_operands = 0 : i64, tpu.core_type = #tpu.core_type<tc>, window_params = [{transform_indices = @transform_0, window_bounds = array<i64: 1, 16, 16, 4>}, {transform_indices = @transform_1, window_bounds = array<i64: 1, 2, 16, 4>}, {transform_indices = @transform_2, window_bounds = array<i64: 1, 2, 16, 4>}, {pipeline_mode = #tpu.pipeline_mode<synchronous>, transform_indices = @transform_3, window_bounds = array<i64: 5, 16, 4>}, {pipeline_mode = #tpu.pipeline_mode<synchronous>, transform_indices = @transform_4, window_bounds = array<i64: 5, 4>}, {pipeline_mode = #tpu.pipeline_mode<synchronous>, transform_indices = @transform_5, window_bounds = array<i64: 1, 4>}, {pipeline_mode = #tpu.pipeline_mode<synchronous>, transform_indices = @transform_6, window_bounds = array<i64: 4, 8>}, {pipeline_mode = #tpu.pipeline_mode<synchronous>, transform_indices = @transform_7, window_bounds = array<i64: 1, 8>}, {transform_indices = @transform_8, window_bounds = array<i64: 1, 8, 256>}]} {
    %c16_i32 = arith.constant 16 : i32
    %0 = arith.muli %arg1, %c16_i32 : i32
    %c0 = arith.constant 0 : index
    %c0_0 = arith.constant 0 : index
    %c0_1 = arith.constant 0 : index
    %c0_2 = arith.constant 0 : index
    %1 = vector.load %arg2[%c0, %c0_0, %c0_1, %c0_2] : memref<1x16x16x4xf32, #tpu.memory_space<vmem>>, vector<1x16x16x4xf32>
    %2 = vector.shape_cast %1 : vector<1x16x16x4xf32> to vector<16x16x4xf32>
    %c2_i32 = arith.constant 2 : i32
    %3 = arith.subi %0, %c2_i32 : i32
    %4 = tpu.iota {dimensions = array<i32: 0>} : vector<2x1x1xi32>
    %5 = vector.broadcast %3 : i32 to vector<2x1x1xi32>
    %6 = arith.addi %5, %4 : vector<2x1x1xi32>
    %c0_i32 = arith.constant 0 : i32
    %7 = vector.broadcast %c0_i32 : i32 to vector<2x1x1xi32>
    %8 = arith.cmpi sge, %6, %7 : vector<2x1x1xi32>
    %c0_3 = arith.constant 0 : index
    %c0_4 = arith.constant 0 : index
    %c0_5 = arith.constant 0 : index
    %c0_6 = arith.constant 0 : index
    %9 = vector.load %arg3[%c0_3, %c0_4, %c0_5, %c0_6] : memref<1x2x16x4xf32, #tpu.memory_space<vmem>>, vector<1x2x16x4xf32>
    %10 = vector.shape_cast %9 : vector<1x2x16x4xf32> to vector<2x16x4xf32>
    %cst = arith.constant 0.000000e+00 : f32
    %11 = vector.shape_cast %8 : vector<2x1x1xi1> to vector<2x1x1xi1>
    %12 = vector.broadcast %11 : vector<2x1x1xi1> to vector<2x16x4xi1>
    %13 = vector.broadcast %cst : f32 to vector<2x16x4xf32>
    %14 = arith.select %12, %10, %13 : vector<2x16x4xi1>, vector<2x16x4xf32>
    %c16_i32_7 = arith.constant 16 : i32
    %15 = arith.addi %0, %c16_i32_7 : i32
    %16 = tpu.iota {dimensions = array<i32: 0>} : vector<2x1x1xi32>
    %17 = vector.broadcast %15 : i32 to vector<2x1x1xi32>
    %18 = arith.addi %17, %16 : vector<2x1x1xi32>
    %c16_i32_8 = arith.constant 16 : i32
    %19 = vector.broadcast %c16_i32_8 : i32 to vector<2x1x1xi32>
    %20 = arith.cmpi slt, %18, %19 : vector<2x1x1xi32>
    %c0_9 = arith.constant 0 : index
    %c0_10 = arith.constant 0 : index
    %c0_11 = arith.constant 0 : index
    %c0_12 = arith.constant 0 : index
    %21 = vector.load %arg4[%c0_9, %c0_10, %c0_11, %c0_12] : memref<1x2x16x4xf32, #tpu.memory_space<vmem>>, vector<1x2x16x4xf32>
    %22 = vector.shape_cast %21 : vector<1x2x16x4xf32> to vector<2x16x4xf32>
    %cst_13 = arith.constant 0.000000e+00 : f32
    %23 = vector.shape_cast %20 : vector<2x1x1xi1> to vector<2x1x1xi1>
    %24 = vector.broadcast %23 : vector<2x1x1xi1> to vector<2x16x4xi1>
    %25 = vector.broadcast %cst_13 : f32 to vector<2x16x4xf32>
    %26 = arith.select %24, %22, %25 : vector<2x16x4xi1>, vector<2x16x4xf32>
    %c0_14 = arith.constant 0 : index
    %c0_15 = arith.constant 0 : index
    %c0_16 = arith.constant 0 : index
    %27 = vector.load %arg5[%c0_14, %c0_15, %c0_16] : memref<5x16x4xf32, #tpu.memory_space<vmem>>, vector<5x16x4xf32>
    %c0_17 = arith.constant 0 : index
    %c0_18 = arith.constant 0 : index
    %28 = vector.load %arg6[%c0_17, %c0_18] : memref<5x4xf32, #tpu.memory_space<vmem>>, vector<5x4xf32>
    %29 = vector.extract_strided_slice %27 {offsets = [2, 0, 0], sizes = [1, 16, 4], strides = [1, 1, 1]} : vector<5x16x4xf32> to vector<1x16x4xf32>
    %30 = vector.shape_cast %29 : vector<1x16x4xf32> to vector<16x4xf32>
    %31 = vector.shape_cast %30 : vector<16x4xf32> to vector<1x16x4xf32>
    %32 = vector.broadcast %31 : vector<1x16x4xf32> to vector<16x16x4xf32>
    %33 = arith.mulf %32, %2 : vector<16x16x4xf32>
    %34 = vector.extract_strided_slice %27 {offsets = [0, 0, 0], sizes = [1, 16, 4], strides = [1, 1, 1]} : vector<5x16x4xf32> to vector<1x16x4xf32>
    %35 = vector.shape_cast %34 : vector<1x16x4xf32> to vector<16x4xf32>
    %c2_i32_19 = arith.constant 2 : i32
    %36 = tpu.dynamic_rotate %2 by %c2_i32_19 dim 1 : vector<16x16x4xf32>, i32 -> vector<16x16x4xf32>
    %37 = vector.shape_cast %35 : vector<16x4xf32> to vector<1x16x4xf32>
    %38 = vector.broadcast %37 : vector<1x16x4xf32> to vector<16x16x4xf32>
    %39 = arith.mulf %38, %36 : vector<16x16x4xf32>
    %40 = arith.addf %33, %39 : vector<16x16x4xf32>
    %41 = vector.extract_strided_slice %27 {offsets = [1, 0, 0], sizes = [1, 16, 4], strides = [1, 1, 1]} : vector<5x16x4xf32> to vector<1x16x4xf32>
    %42 = vector.shape_cast %41 : vector<1x16x4xf32> to vector<16x4xf32>
    %c1_i32 = arith.constant 1 : i32
    %43 = tpu.dynamic_rotate %2 by %c1_i32 dim 1 : vector<16x16x4xf32>, i32 -> vector<16x16x4xf32>
    %44 = vector.shape_cast %42 : vector<16x4xf32> to vector<1x16x4xf32>
    %45 = vector.broadcast %44 : vector<1x16x4xf32> to vector<16x16x4xf32>
    %46 = arith.mulf %45, %43 : vector<16x16x4xf32>
    %47 = arith.addf %40, %46 : vector<16x16x4xf32>
    %48 = vector.extract_strided_slice %27 {offsets = [3, 0, 0], sizes = [1, 16, 4], strides = [1, 1, 1]} : vector<5x16x4xf32> to vector<1x16x4xf32>
    %49 = vector.shape_cast %48 : vector<1x16x4xf32> to vector<16x4xf32>
    %c15_i32 = arith.constant 15 : i32
    %50 = tpu.dynamic_rotate %2 by %c15_i32 dim 1 : vector<16x16x4xf32>, i32 -> vector<16x16x4xf32>
    %51 = vector.shape_cast %49 : vector<16x4xf32> to vector<1x16x4xf32>
    %52 = vector.broadcast %51 : vector<1x16x4xf32> to vector<16x16x4xf32>
    %53 = arith.mulf %52, %50 : vector<16x16x4xf32>
    %54 = arith.addf %47, %53 : vector<16x16x4xf32>
    %55 = vector.extract_strided_slice %27 {offsets = [4, 0, 0], sizes = [1, 16, 4], strides = [1, 1, 1]} : vector<5x16x4xf32> to vector<1x16x4xf32>
    %56 = vector.shape_cast %55 : vector<1x16x4xf32> to vector<16x4xf32>
    %c14_i32 = arith.constant 14 : i32
    %57 = tpu.dynamic_rotate %2 by %c14_i32 dim 1 : vector<16x16x4xf32>, i32 -> vector<16x16x4xf32>
    %58 = vector.shape_cast %56 : vector<16x4xf32> to vector<1x16x4xf32>
    %59 = vector.broadcast %58 : vector<1x16x4xf32> to vector<16x16x4xf32>
    %60 = arith.mulf %59, %57 : vector<16x16x4xf32>
    %61 = arith.addf %54, %60 : vector<16x16x4xf32>
    %62 = tpu.concatenate %14, %2, %26 in 0 : vector<2x16x4xf32>, vector<16x16x4xf32>, vector<2x16x4xf32> -> vector<20x16x4xf32>
    %63 = vector.extract_strided_slice %28 {offsets = [0, 0], sizes = [1, 4], strides = [1, 1]} : vector<5x4xf32> to vector<1x4xf32>
    %64 = vector.shape_cast %63 : vector<1x4xf32> to vector<4xf32>
    %65 = vector.extract_strided_slice %62 {offsets = [0, 0, 0], sizes = [16, 16, 4], strides = [1, 1, 1]} : vector<20x16x4xf32> to vector<16x16x4xf32>
    %66 = vector.shape_cast %64 : vector<4xf32> to vector<1x1x4xf32>
    %67 = vector.broadcast %66 : vector<1x1x4xf32> to vector<16x16x4xf32>
    %68 = arith.mulf %67, %65 : vector<16x16x4xf32>
    %69 = arith.addf %61, %68 : vector<16x16x4xf32>
    %70 = vector.extract_strided_slice %28 {offsets = [1, 0], sizes = [1, 4], strides = [1, 1]} : vector<5x4xf32> to vector<1x4xf32>
    %71 = vector.shape_cast %70 : vector<1x4xf32> to vector<4xf32>
    %72 = vector.extract_strided_slice %62 {offsets = [1, 0, 0], sizes = [16, 16, 4], strides = [1, 1, 1]} : vector<20x16x4xf32> to vector<16x16x4xf32>
    %73 = vector.shape_cast %71 : vector<4xf32> to vector<1x1x4xf32>
    %74 = vector.broadcast %73 : vector<1x1x4xf32> to vector<16x16x4xf32>
    %75 = arith.mulf %74, %72 : vector<16x16x4xf32>
    %76 = arith.addf %69, %75 : vector<16x16x4xf32>
    %77 = vector.extract_strided_slice %28 {offsets = [2, 0], sizes = [1, 4], strides = [1, 1]} : vector<5x4xf32> to vector<1x4xf32>
    %78 = vector.shape_cast %77 : vector<1x4xf32> to vector<4xf32>
    %79 = vector.extract_strided_slice %62 {offsets = [2, 0, 0], sizes = [16, 16, 4], strides = [1, 1, 1]} : vector<20x16x4xf32> to vector<16x16x4xf32>
    %80 = vector.shape_cast %78 : vector<4xf32> to vector<1x1x4xf32>
    %81 = vector.broadcast %80 : vector<1x1x4xf32> to vector<16x16x4xf32>
    %82 = arith.mulf %81, %79 : vector<16x16x4xf32>
    %83 = arith.addf %76, %82 : vector<16x16x4xf32>
    %84 = vector.extract_strided_slice %28 {offsets = [3, 0], sizes = [1, 4], strides = [1, 1]} : vector<5x4xf32> to vector<1x4xf32>
    %85 = vector.shape_cast %84 : vector<1x4xf32> to vector<4xf32>
    %86 = vector.extract_strided_slice %62 {offsets = [3, 0, 0], sizes = [16, 16, 4], strides = [1, 1, 1]} : vector<20x16x4xf32> to vector<16x16x4xf32>
    %87 = vector.shape_cast %85 : vector<4xf32> to vector<1x1x4xf32>
    %88 = vector.broadcast %87 : vector<1x1x4xf32> to vector<16x16x4xf32>
    %89 = arith.mulf %88, %86 : vector<16x16x4xf32>
    %90 = arith.addf %83, %89 : vector<16x16x4xf32>
    %91 = vector.extract_strided_slice %28 {offsets = [4, 0], sizes = [1, 4], strides = [1, 1]} : vector<5x4xf32> to vector<1x4xf32>
    %92 = vector.shape_cast %91 : vector<1x4xf32> to vector<4xf32>
    %93 = vector.extract_strided_slice %62 {offsets = [4, 0, 0], sizes = [16, 16, 4], strides = [1, 1, 1]} : vector<20x16x4xf32> to vector<16x16x4xf32>
    %94 = vector.shape_cast %92 : vector<4xf32> to vector<1x1x4xf32>
    %95 = vector.broadcast %94 : vector<1x1x4xf32> to vector<16x16x4xf32>
    %96 = arith.mulf %95, %93 : vector<16x16x4xf32>
    %97 = arith.addf %90, %96 : vector<16x16x4xf32>
    %c0_20 = arith.constant 0 : index
    %c0_21 = arith.constant 0 : index
    %98 = vector.load %arg7[%c0_20, %c0_21] : memref<1x4xf32, #tpu.memory_space<vmem>>, vector<1x4xf32>
    %99 = vector.shape_cast %98 : vector<1x4xf32> to vector<1x1x4xf32>
    %100 = vector.broadcast %99 : vector<1x1x4xf32> to vector<16x16x4xf32>
    %101 = arith.addf %97, %100 : vector<16x16x4xf32>
    %cst_22 = arith.constant 0.000000e+00 : f32
    %102 = vector.broadcast %cst_22 : f32 to vector<16x16x4xf32>
    %103 = arith.maximumf %101, %102 : vector<16x16x4xf32>
    %104 = vector.shape_cast %103 : vector<16x16x4xf32> to vector<256x4xf32>
    %105 = arith.truncf %104 : vector<256x4xf32> to vector<256x4xbf16>
    %c0_23 = arith.constant 0 : index
    %c0_24 = arith.constant 0 : index
    %106 = vector.load %arg8[%c0_23, %c0_24] : memref<4x8xbf16, #tpu.memory_space<vmem>>, vector<4x8xbf16>
    %cst_25 = arith.constant dense<0.000000e+00> : vector<256x8xf32>
    %107 = tpu.matmul %105, %106, %cst_25 {dimension_numbers = #tpu.dot_dimension_numbers<[1], [0], [0], [1], [0, 0, 1, 1], [], []>} : vector<256x4xbf16>, vector<4x8xbf16>, vector<256x8xf32> -> vector<256x8xf32>
    %c0_26 = arith.constant 0 : index
    %c0_27 = arith.constant 0 : index
    %108 = vector.load %arg9[%c0_26, %c0_27] : memref<1x8xf32, #tpu.memory_space<vmem>>, vector<1x8xf32>
    %109 = vector.broadcast %108 : vector<1x8xf32> to vector<256x8xf32>
    %110 = arith.addf %107, %109 : vector<256x8xf32>
    %111 = tpu.transpose %110, [1, 0] : vector<256x8xf32> -> vector<8x256xf32>
    %112 = vector.shape_cast %111 : vector<8x256xf32> to vector<1x8x256xf32>
    %c0_28 = arith.constant 0 : index
    %c0_29 = arith.constant 0 : index
    %c0_30 = arith.constant 0 : index
    %113 = vector.load %arg10[%c0_28, %c0_29, %c0_30] : memref<1x8x256xf32, #tpu.memory_space<vmem>>, vector<1x8x256xf32>
    tpu.vector_store %arg10[%c0_28, %c0_29, %c0_30], %112 {strides = array<i32>} : memref<1x8x256xf32, #tpu.memory_space<vmem>>, vector<1x8x256xf32>,
    return
  }
  func.func @transform_0(%arg0: i32, %arg1: i32) -> (i32, i32, i32, i32) {
    %c0_i32 = arith.constant 0 : i32
    %c0_i32_0 = arith.constant 0 : i32
    %c0_i32_1 = arith.constant 0 : i32
    return %arg0, %arg1, %c0_i32, %c0_i32_0 : i32, i32, i32, i32
  }
  func.func @transform_1(%arg0: i32, %arg1: i32) -> (i32, i32, i32, i32) {
    %c8_i32 = arith.constant 8 : i32
    %0 = arith.muli %arg1, %c8_i32 : i32
    %c1_i32 = arith.constant 1 : i32
    %1 = arith.subi %0, %c1_i32 : i32
    %c0_i32 = arith.constant 0 : i32
    %2 = arith.maxsi %1, %c0_i32 : i32
    %c0_i32_0 = arith.constant 0 : i32
    %c0_i32_1 = arith.constant 0 : i32
    %c0_i32_2 = arith.constant 0 : i32
    return %arg0, %2, %c0_i32_0, %c0_i32_1 : i32, i32, i32, i32
  }
  func.func @transform_2(%arg0: i32, %arg1: i32) -> (i32, i32, i32, i32) {
    %c1_i32 = arith.constant 1 : i32
    %0 = arith.addi %arg1, %c1_i32 : i32
    %c8_i32 = arith.constant 8 : i32
    %1 = arith.muli %0, %c8_i32 : i32
    %c7_i32 = arith.constant 7 : i32
    %2 = arith.minsi %1, %c7_i32 : i32
    %c0_i32 = arith.constant 0 : i32
    %c0_i32_0 = arith.constant 0 : i32
    %c0_i32_1 = arith.constant 0 : i32
    return %arg0, %2, %c0_i32, %c0_i32_0 : i32, i32, i32, i32
  }
  func.func @transform_3(%arg0: i32, %arg1: i32) -> (i32, i32, i32) {
    %c0_i32 = arith.constant 0 : i32
    %c0_i32_0 = arith.constant 0 : i32
    %c0_i32_1 = arith.constant 0 : i32
    %c0_i32_2 = arith.constant 0 : i32
    return %c0_i32, %c0_i32_0, %c0_i32_1 : i32, i32, i32
  }
  func.func @transform_4(%arg0: i32, %arg1: i32) -> (i32, i32) {
    %c0_i32 = arith.constant 0 : i32
    %c0_i32_0 = arith.constant 0 : i32
    %c0_i32_1 = arith.constant 0 : i32
    return %c0_i32, %c0_i32_0 : i32, i32
  }
  func.func @transform_5(%arg0: i32, %arg1: i32) -> (i32, i32) {
    %c0_i32 = arith.constant 0 : i32
    %c0_i32_0 = arith.constant 0 : i32
    %c0_i32_1 = arith.constant 0 : i32
    return %c0_i32, %c0_i32_0 : i32, i32
  }
  func.func @transform_6(%arg0: i32, %arg1: i32) -> (i32, i32) {
    %c0_i32 = arith.constant 0 : i32
    %c0_i32_0 = arith.constant 0 : i32
    %c0_i32_1 = arith.constant 0 : i32
    return %c0_i32, %c0_i32_0 : i32, i32
  }
  func.func @transform_7(%arg0: i32, %arg1: i32) -> (i32, i32) {
    %c0_i32 = arith.constant 0 : i32
    %c0_i32_0 = arith.constant 0 : i32
    %c0_i32_1 = arith.constant 0 : i32
    return %c0_i32, %c0_i32_0 : i32, i32
  }
  func.func @transform_8(%arg0: i32, %arg1: i32) -> (i32, i32, i32) {
    %c0_i32 = arith.constant 0 : i32
    %c0_i32_0 = arith.constant 0 : i32
    return %arg0, %c0_i32, %arg1 : i32, i32, i32
  }
}

</mosaic_0001>

<llo_original>
// kernel: tpu_custom_call.1
$region0: #{tpu_custom_call.1}
  #allocation0 [shape = 'u32[]', space=smem, size = 0x4, offset = 0x4, fixed_abs, tag = 'smem constant byte address 0x4 - core index']
  #allocation1 [shape = 'u32[144,128]{1,0:T(1,128)}', space=vmem, size = 0x12000, scoped, tag = 'internal scratch']
  %s0 = inlined_call_operand.vmem [shape: f32[2,16,16,4], index: 0, kind: input, shape index: {}]
  %s1 = inlined_call_operand.vmem [shape: f32[2,16,16,4], index: 1, kind: input, shape index: {}]
  %s2 = inlined_call_operand.vmem [shape: f32[2,16,16,4], index: 2, kind: input, shape index: {}]
  %s3 = inlined_call_operand.vmem [shape: f32[5,16,4], index: 3, kind: input, shape index: {}]
  %s4 = inlined_call_operand.vmem [shape: f32[5,4], index: 4, kind: input, shape index: {}]
  %s5 = inlined_call_operand.vmem [shape: f32[1,4], index: 5, kind: input, shape index: {}]
  %s6 = inlined_call_operand.vmem [shape: bf16[4,8], index: 6, kind: input, shape index: {}]
  %s7 = inlined_call_operand.vmem [shape: f32[1,8], index: 7, kind: input, shape index: {}]
  %s8 = inlined_call_operand.hbm [shape: f32[2,8,256], index: 8, kind: output, shape index: {}]
  %s9 = sld [smem:[#allocation0]]
  $region65: #{tpu_custom_call.1} parent=0
    _
  %s11 = ssub.s32 1, %s9
  %s12 = scalar_select 0, %s11, %s9
  $region1: #{tpu_custom_call.1} parent=0
    #allocation2 [shape = 'u8[16384]{0}', space=vmem, size = 0x4000, scoped, tag = 'output window, operand 0']
    #allocation3 [shape = 's32[2]{0}', space=sflag, size = 0x8, scoped, tag = 'scoped memory for tpu_custom_call.1']
    %13 = vsyncpa [#allocation3], 0
    %s14 = scalar_lea.sflag [#allocation3], 1
    %15 = vsyncpa %s14, 0
    loop: start=0, step=1, limit=4
    $region2: #{tpu_custom_call.1} parent=1 // loop_pre_header
      _
    $region3: #{tpu_custom_call.1} parent=1 // loop_header
      %s17 = sphi 0, %s21
      %p18 = scmp.ge.s32.totalorder %s17, 4
      %s24 = sphi 0, %s36
      %s25 = sphi 0, %s32
      %s26 = sphi 0, %s24
      %s27 = sphi 0, %s25
      %s28 = sphi 0, %s26
      %s29 = sphi 0, %s27
      %s41 = sphi 0, %s43
      %s44 = sphi 0, %s41
      %s45 = sphi 0, %s44
      %s61 = sphi 0, %s45
      %s77 = sphi 0, %s79
      %s80 = sphi 0, %s77
      %s81 = sphi 0, %s80
      %s97 = sphi 0, %s81
      %s113 = sphi 0, %s115
      %s116 = sphi 0, %s113
      %s117 = sphi 0, %s116
      %s133 = sphi 0, %s117
      %s137 = sphi 0, %s137
      %s139 = sphi 0, %s137
      %s140 = sphi 0, %s139
      %s154 = sphi 0, %s140
      %s158 = sphi 0, %s158
      %s160 = sphi 0, %s158
      %s161 = sphi 0, %s160
      %s175 = sphi 0, %s161
      %s179 = sphi 0, %s179
      %s181 = sphi 0, %s179
      %s182 = sphi 0, %s181
      %s196 = sphi 0, %s182
      %s200 = sphi 0, %s200
      %s202 = sphi 0, %s200
      %s203 = sphi 0, %s202
      %s217 = sphi 0, %s203
      %s221 = sphi 0, %s221
      %s223 = sphi 0, %s221
      %s224 = sphi 0, %s223
      %s238 = sphi 0, %s224
      %s246 = sphi 0, %s248
      %s249 = sphi 0, %s246
      %s250 = sphi 0, %s249
      %s266 = sphi 0, %s250
    $region4: #{tpu_custom_call.1} parent=1 // loop_header_branch
      %20 = sbr.rel (%p18) target = $region8
    $region5: #{tpu_custom_call.1} parent=1 // loop_body
      %s22 = ssub.s32 %s17, 1
      %s23 = ssub.s32 %s17, 2
      %s30 = sadd.s32 1, %s25
      %p31 = scmp.ge.s32.totalorder %s30, 1
      %s32 = scalar_select %p31, 0, %s30
      %s33 = sadd.s32 1, %s24
      %s34 = scalar_select %p31, %s33, %s24
      %p35 = scmp.ge.s32.totalorder %s34, 2
      %s36 = scalar_select %p35, 0, %s34
      %s37 = ssub.s32 %s24, %s36
      %s38 = ssub.s32 %s25, %s32
      %s39 = sor.u32 %s37, %s38
      %p40 = scmp.eq.s32.totalorder %s39, 0
      %s42 = sadd.s32 %s41, 1
      %s43 = scalar_select %p40, %s41, %s42
      %p46 = pneg %p40
      %p47 = scmp.eq.s32.totalorder %s17, 1
      %p48 = por %p46, %p47
      %p49 = scmp.ne.s32.totalorder %s41, %s44
      %p50 = scmp.eq.s32.totalorder %s17, 0
      %p51 = por %p49, %p50
      %p52 = scmp.ne.s32.totalorder %s41, %s44
      %p53 = scmp.eq.s32.totalorder %s22, 1
      %p54 = por %p52, %p53
      %p55 = scmp.ne.s32.totalorder %s44, %s45
      %p56 = scmp.eq.s32.totalorder %s22, 0
      %p57 = por %p55, %p56
      %p58 = scmp.ne.s32.totalorder %s44, %s45
      %p59 = scmp.eq.s32.totalorder %s23, 1
      %p60 = por %p58, %p59
      %p62 = scmp.ne.s32.totalorder %s45, %s61
      %p63 = scmp.eq.s32.totalorder %s23, 0
      %p64 = por %p62, %p63
      %s65 = smul.u32 %s25, 8
      %s66 = ssub.s32 %s65, 1
      %p67 = scmp.gt.s32.totalorder %s66, 0
      %s68 = scalar_select %p67, %s66, 0
      %s69 = smul.u32 %s32, 8
      %s70 = ssub.s32 %s69, 1
      %p71 = scmp.gt.s32.totalorder %s70, 0
      %s72 = scalar_select %p71, %s70, 0
      %s73 = ssub.s32 %s24, %s36
      %s74 = ssub.s32 %s68, %s72
      %s75 = sor.u32 %s73, %s74
      %p76 = scmp.eq.s32.totalorder %s75, 0
      %s78 = sadd.s32 %s77, 1
      %s79 = scalar_select %p76, %s77, %s78
      %p82 = pneg %p76
      %p83 = scmp.eq.s32.totalorder %s17, 1
      %p84 = por %p82, %p83
      %p85 = scmp.ne.s32.totalorder %s77, %s80
      %p86 = scmp.eq.s32.totalorder %s17, 0
      %p87 = por %p85, %p86
      %p88 = scmp.ne.s32.totalorder %s77, %s80
      %p89 = scmp.eq.s32.totalorder %s22, 1
      %p90 = por %p88, %p89
      %p91 = scmp.ne.s32.totalorder %s80, %s81
      %p92 = scmp.eq.s32.totalorder %s22, 0
      %p93 = por %p91, %p92
      %p94 = scmp.ne.s32.totalorder %s80, %s81
      %p95 = scmp.eq.s32.totalorder %s23, 1
      %p96 = por %p94, %p95
      %p98 = scmp.ne.s32.totalorder %s81, %s97
      %p99 = scmp.eq.s32.totalorder %s23, 0
      %p100 = por %p98, %p99
      %s101 = sadd.s32 %s25, 1
      %s102 = smul.u32 %s101, 8
      %p103 = scmp.lt.s32.totalorder %s102, 7
      %s104 = scalar_select %p103, %s102, 7
      %s105 = sadd.s32 %s32, 1
      %s106 = smul.u32 %s105, 8
      %p107 = scmp.lt.s32.totalorder %s106, 7
      %s108 = scalar_select %p107, %s106, 7
      %s109 = ssub.s32 %s24, %s36
      %s110 = ssub.s32 %s104, %s108
      %s111 = sor.u32 %s109, %s110
      %p112 = scmp.eq.s32.totalorder %s111, 0
      %s114 = sadd.s32 %s113, 1
      %s115 = scalar_select %p112, %s113, %s114
      %p118 = pneg %p112
      %p119 = scmp.eq.s32.totalorder %s17, 1
      %p120 = por %p118, %p119
      %p121 = scmp.ne.s32.totalorder %s113, %s116
      %p122 = scmp.eq.s32.totalorder %s17, 0
      %p123 = por %p121, %p122
      %p124 = scmp.ne.s32.totalorder %s113, %s116
      %p125 = scmp.eq.s32.totalorder %s22, 1
      %p126 = por %p124, %p125
      %p127 = scmp.ne.s32.totalorder %s116, %s117
      %p128 = scmp.eq.s32.totalorder %s22, 0
      %p129 = por %p127, %p128
      %p130 = scmp.ne.s32.totalorder %s116, %s117
      %p131 = scmp.eq.s32.totalorder %s23, 1
      %p132 = por %p130, %p131
      %p134 = scmp.ne.s32.totalorder %s117, %s133
      %p135 = scmp.eq.s32.totalorder %s23, 0
      %p136 = por %p134, %p135
      %s138 = sadd.s32 %s137, 1
      %p141 = scmp.eq.s32.totalorder %s17, 1
      %p142 = scmp.ne.s32.totalorder %s137, %s139
      %p143 = scmp.eq.s32.totalorder %s17, 0
      %p144 = por %p142, %p143
      %p145 = scmp.ne.s32.totalorder %s137, %s139
      %p146 = scmp.eq.s32.totalorder %s22, 1
      %p147 = por %p145, %p146
      %p148 = scmp.ne.s32.totalorder %s139, %s140
      %p149 = scmp.eq.s32.totalorder %s22, 0
      %p150 = por %p148, %p149
      %p151 = scmp.ne.s32.totalorder %s139, %s140
      %p152 = scmp.eq.s32.totalorder %s23, 1
      %p153 = por %p151, %p152
      %p155 = scmp.ne.s32.totalorder %s140, %s154
      %p156 = scmp.eq.s32.totalorder %s23, 0
      %p157 = por %p155, %p156
      %s159 = sadd.s32 %s158, 1
      %p162 = scmp.eq.s32.totalorder %s17, 1
      %p163 = scmp.ne.s32.totalorder %s158, %s160
      %p164 = scmp.eq.s32.totalorder %s17, 0
      %p165 = por %p163, %p164
      %p166 = scmp.ne.s32.totalorder %s158, %s160
      %p167 = scmp.eq.s32.totalorder %s22, 1
      %p168 = por %p166, %p167
      %p169 = scmp.ne.s32.totalorder %s160, %s161
      %p170 = scmp.eq.s32.totalorder %s22, 0
      %p171 = por %p169, %p170
      %p172 = scmp.ne.s32.totalorder %s160, %s161
      %p173 = scmp.eq.s32.totalorder %s23, 1
      %p174 = por %p172, %p173
      %p176 = scmp.ne.s32.totalorder %s161, %s175
      %p177 = scmp.eq.s32.totalorder %s23, 0
      %p178 = por %p176, %p177
      %s180 = sadd.s32 %s179, 1
      %p183 = scmp.eq.s32.totalorder %s17, 1
      %p184 = scmp.ne.s32.totalorder %s179, %s181
      %p185 = scmp.eq.s32.totalorder %s17, 0
      %p186 = por %p184, %p185
      %p187 = scmp.ne.s32.totalorder %s179, %s181
      %p188 = scmp.eq.s32.totalorder %s22, 1
      %p189 = por %p187, %p188
      %p190 = scmp.ne.s32.totalorder %s181, %s182
      %p191 = scmp.eq.s32.totalorder %s22, 0
      %p192 = por %p190, %p191
      %p193 = scmp.ne.s32.totalorder %s181, %s182
      %p194 = scmp.eq.s32.totalorder %s23, 1
      %p195 = por %p193, %p194
      %p197 = scmp.ne.s32.totalorder %s182, %s196
      %p198 = scmp.eq.s32.totalorder %s23, 0
      %p199 = por %p197, %p198
      %s201 = sadd.s32 %s200, 1
      %p204 = scmp.eq.s32.totalorder %s17, 1
      %p205 = scmp.ne.s32.totalorder %s200, %s202
      %p206 = scmp.eq.s32.totalorder %s17, 0
      %p207 = por %p205, %p206
      %p208 = scmp.ne.s32.totalorder %s200, %s202
      %p209 = scmp.eq.s32.totalorder %s22, 1
      %p210 = por %p208, %p209
      %p211 = scmp.ne.s32.totalorder %s202, %s203
      %p212 = scmp.eq.s32.totalorder %s22, 0
      %p213 = por %p211, %p212
      %p214 = scmp.ne.s32.totalorder %s202, %s203
      %p215 = scmp.eq.s32.totalorder %s23, 1
      %p216 = por %p214, %p215
      %p218 = scmp.ne.s32.totalorder %s203, %s217
      %p219 = scmp.eq.s32.totalorder %s23, 0
      %p220 = por %p218, %p219
      %s222 = sadd.s32 %s221, 1
      %p225 = scmp.eq.s32.totalorder %s17, 1
      %p226 = scmp.ne.s32.totalorder %s221, %s223
      %p227 = scmp.eq.s32.totalorder %s17, 0
      %p228 = por %p226, %p227
      %p229 = scmp.ne.s32.totalorder %s221, %s223
      %p230 = scmp.eq.s32.totalorder %s22, 1
      %p231 = por %p229, %p230
      %p232 = scmp.ne.s32.totalorder %s223, %s224
      %p233 = scmp.eq.s32.totalorder %s22, 0
      %p234 = por %p232, %p233
      %p235 = scmp.ne.s32.totalorder %s223, %s224
      %p236 = scmp.eq.s32.totalorder %s23, 1
      %p237 = por %p235, %p236
      %p239 = scmp.ne.s32.totalorder %s224, %s238
      %p240 = scmp.eq.s32.totalorder %s23, 0
      %p241 = por %p239, %p240
      %s242 = ssub.s32 %s24, %s36
      %s243 = ssub.s32 %s25, %s32
      %s244 = sor.u32 %s242, %s243
      %p245 = scmp.eq.s32.totalorder %s244, 0
      %s247 = sadd.s32 %s246, 1
      %s248 = scalar_select %p245, %s246, %s247
      %p251 = pneg %p245
      %p252 = scmp.eq.s32.totalorder %s17, 1
      %p253 = por %p251, %p252
      %p254 = scmp.ne.s32.totalorder %s246, %s249
      %p255 = scmp.eq.s32.totalorder %s17, 0
      %p256 = por %p254, %p255
      %p257 = scmp.ne.s32.totalorder %s246, %s249
      %p258 = scmp.eq.s32.totalorder %s22, 1
      %p259 = por %p257, %p258
      %p260 = scmp.ne.s32.totalorder %s249, %s250
      %p261 = scmp.eq.s32.totalorder %s22, 0
      %p262 = por %p260, %p261
      %p263 = scmp.ne.s32.totalorder %s249, %s250
      %p264 = scmp.eq.s32.totalorder %s23, 1
      %p265 = por %p263, %p264
      %p267 = scmp.ne.s32.totalorder %s250, %s266
      %p268 = scmp.eq.s32.totalorder %s23, 0
      %p269 = por %p267, %p268
      %p270 = scmp.le.s32.totalorder 1, %s17
      %p271 = scmp.lt.s32.totalorder %s17, 3
      %p272 = pnand %p270, %p271
      %p273 = pneg %p272
      // Predicated region
      $region9: #{tpu_custom_call.1} parent=5 // pred_check
        _
      $region10: #{tpu_custom_call.1} parent=5 // pred_check_branch
        %275 = sbr.rel (%p272) target = $region12
      $region11: #{tpu_custom_call.1} parent=5 // pred_region
        %s276 = ssub.s32 %s17, 1
        // Predicated region
        $region13: #{tpu_custom_call.1} parent=11 // pred_check
          %p277 = pneg %p150
        $region14: #{tpu_custom_call.1} parent=11 // pred_check_branch
          %279 = sbr.rel (%p277) target = $region16
        $region15: #{tpu_custom_call.1} parent=11 // pred_region
          _
        $region16: #{tpu_custom_call.1} parent=11 // pred_fallthru
          _
        // Predicated region
        $region17: #{tpu_custom_call.1} parent=11 // pred_check
          %p280 = pneg %p171
        $region18: #{tpu_custom_call.1} parent=11 // pred_check_branch
          %282 = sbr.rel (%p280) target = $region20
        $region19: #{tpu_custom_call.1} parent=11 // pred_region
          _
        $region20: #{tpu_custom_call.1} parent=11 // pred_fallthru
          _
        // Predicated region
        $region21: #{tpu_custom_call.1} parent=11 // pred_check
          %p283 = pneg %p192
        $region22: #{tpu_custom_call.1} parent=11 // pred_check_branch
          %285 = sbr.rel (%p283) target = $region24
        $region23: #{tpu_custom_call.1} parent=11 // pred_region
          _
        $region24: #{tpu_custom_call.1} parent=11 // pred_fallthru
          _
        // Predicated region
        $region25: #{tpu_custom_call.1} parent=11 // pred_check
          %p286 = pneg %p213
        $region26: #{tpu_custom_call.1} parent=11 // pred_check_branch
          %288 = sbr.rel (%p286) target = $region28
        $region27: #{tpu_custom_call.1} parent=11 // pred_region
          _
        $region28: #{tpu_custom_call.1} parent=11 // pred_fallthru
          _
        // Predicated region
        $region29: #{tpu_custom_call.1} parent=11 // pred_check
          %p289 = pneg %p234
        $region30: #{tpu_custom_call.1} parent=11 // pred_check_branch
          %291 = sbr.rel (%p289) target = $region32
        $region31: #{tpu_custom_call.1} parent=11 // pred_region
          _
        $region32: #{tpu_custom_call.1} parent=11 // pred_fallthru
          _
      $region12: #{tpu_custom_call.1} parent=5 // pred_fallthru
        _
      %p292 = scmp.lt.s32.totalorder %s17, 2
      // Predicated region
      $region33: #{tpu_custom_call.1} parent=5 // pred_check
        %p293 = pneg %p292
      $region34: #{tpu_custom_call.1} parent=5 // pred_check_branch
        %295 = sbr.rel (%p293) target = $region36
      $region35: #{tpu_custom_call.1} parent=5 // pred_region
        // Predicated region
        $region37: #{tpu_custom_call.1} parent=35 // pred_check
          %p296 = pneg %p51
        $region38: #{tpu_custom_call.1} parent=35 // pred_check_branch
          %298 = sbr.rel (%p296) target = $region40
        $region39: #{tpu_custom_call.1} parent=35 // pred_region
          %s299 = smul.u32 16, %s25
          %p300 = scmp.lt.s32.totalorder %s24, 1
          %s301 = scalar_select %p300, %s24, 1
          %p302 = scmp.lt.s32.totalorder %s299, 15
          %s303 = scalar_select %p302, %s299, 15
          %s304 = smul.addr %s303, 2
          %s305 = smul.addr %s301, 32
          %s306 = sadd.s32 %s304, %s305
          %s307 = smul.addr %s306, 8
          %s308 = scalar_lea.vmem %s0, %s307
          %s309 = smul.u32 16, %s25
        $region40: #{tpu_custom_call.1} parent=35 // pred_fallthru
          _
        // Predicated region
        $region41: #{tpu_custom_call.1} parent=35 // pred_check
          %p310 = pneg %p87
        $region42: #{tpu_custom_call.1} parent=35 // pred_check_branch
          %312 = sbr.rel (%p310) target = $region44
        $region43: #{tpu_custom_call.1} parent=35 // pred_region
          %s313 = smul.u32 %s25, 8
          %s314 = ssub.s32 %s313, 1
          %p315 = scmp.gt.s32.totalorder %s314, 0
          %s316 = scalar_select %p315, %s314, 0
          %s317 = smul.u32 2, %s316
          %p318 = scmp.lt.s32.totalorder %s24, 1
          %s319 = scalar_select %p318, %s24, 1
          %p320 = scmp.lt.s32.totalorder %s317, 15
          %s321 = scalar_select %p320, %s317, 15
          %s322 = smul.addr %s321, 2
          %s323 = smul.addr %s319, 32
          %s324 = sadd.s32 %s322, %s323
          %s325 = smul.addr %s324, 8
          %s326 = scalar_lea.vmem %s1, %s325
          %s327 = smul.u32 %s25, 8
          %s328 = ssub.s32 %s327, 1
          %p329 = scmp.gt.s32.totalorder %s328, 0
          %s330 = scalar_select %p329, %s328, 0
          %s331 = smul.u32 2, %s330
        $region44: #{tpu_custom_call.1} parent=35 // pred_fallthru
          _
        // Predicated region
        $region45: #{tpu_custom_call.1} parent=35 // pred_check
          %p332 = pneg %p123
        $region46: #{tpu_custom_call.1} parent=35 // pred_check_branch
          %334 = sbr.rel (%p332) target = $region48
        $region47: #{tpu_custom_call.1} parent=35 // pred_region
          %s335 = sadd.s32 %s25, 1
          %s336 = smul.u32 %s335, 8
          %p337 = scmp.lt.s32.totalorder %s336, 7
          %s338 = scalar_select %p337, %s336, 7
          %s339 = smul.u32 2, %s338
          %p340 = scmp.lt.s32.totalorder %s24, 1
          %s341 = scalar_select %p340, %s24, 1
          %p342 = scmp.lt.s32.totalorder %s339, 15
          %s343 = scalar_select %p342, %s339, 15
          %s344 = smul.addr %s343, 2
          %s345 = smul.addr %s341, 32
          %s346 = sadd.s32 %s344, %s345
          %s347 = smul.addr %s346, 8
          %s348 = scalar_lea.vmem %s2, %s347
          %s349 = sadd.s32 %s25, 1
          %s350 = smul.u32 %s349, 8
          %p351 = scmp.lt.s32.totalorder %s350, 7
          %s352 = scalar_select %p351, %s350, 7
          %s353 = smul.u32 2, %s352
        $region48: #{tpu_custom_call.1} parent=35 // pred_fallthru
          _
      $region36: #{tpu_custom_call.1} parent=5 // pred_fallthru
        _
      %p354 = scmp.le.s32.totalorder 1, %s17
      %p355 = scmp.lt.s32.totalorder %s17, 3
      %p356 = pnand %p354, %p355
      %p357 = pneg %p356
      // Predicated region
      $region49: #{tpu_custom_call.1} parent=5 // pred_check
        _
      $region50: #{tpu_custom_call.1} parent=5 // pred_check_branch
        %359 = sbr.rel (%p356) target = $region52
      $region51: #{tpu_custom_call.1} parent=5 // pred_region
        %s360 = ssub.s32 %s17, 1
        %s361 = smul.u32 16, %s27
        %p362 = scmp.lt.s32.totalorder %s26, 1
        %s363 = scalar_select %p362, %s26, 1
        %p364 = scmp.lt.s32.totalorder %s361, 15
        %s365 = scalar_select %p364, %s361, 15
        %s366 = smul.addr %s365, 2
        %s367 = smul.addr %s363, 32
        %s368 = sadd.s32 %s366, %s367
        %s369 = smul.addr %s368, 8
        %s370 = scalar_lea.vmem %s0, %s369
        %p371 = pneg %p57
        %p372 = pneg %p54
        %s373 = smul.u32 %s27, 8
        %s374 = ssub.s32 %s373, 1
        %p375 = scmp.gt.s32.totalorder %s374, 0
        %s376 = scalar_select %p375, %s374, 0
        %s377 = smul.u32 2, %s376
        %p378 = scmp.lt.s32.totalorder %s26, 1
        %s379 = scalar_select %p378, %s26, 1
        %p380 = scmp.lt.s32.totalorder %s377, 15
        %s381 = scalar_select %p380, %s377, 15
        %s382 = smul.addr %s381, 2
        %s383 = smul.addr %s379, 32
        %s384 = sadd.s32 %s382, %s383
        %s385 = smul.addr %s384, 8
        %s386 = scalar_lea.vmem %s1, %s385
        %p387 = pneg %p93
        %p388 = pneg %p90
        %s389 = sadd.s32 %s27, 1
        %s390 = smul.u32 %s389, 8
        %p391 = scmp.lt.s32.totalorder %s390, 7
        %s392 = scalar_select %p391, %s390, 7
        %s393 = smul.u32 2, %s392
        %p394 = scmp.lt.s32.totalorder %s26, 1
        %s395 = scalar_select %p394, %s26, 1
        %p396 = scmp.lt.s32.totalorder %s393, 15
        %s397 = scalar_select %p396, %s393, 15
        %s398 = smul.addr %s397, 2
        %s399 = smul.addr %s395, 32
        %s400 = sadd.s32 %s398, %s399
        %s401 = smul.addr %s400, 8
        %s402 = scalar_lea.vmem %s2, %s401
        %p403 = pneg %p129
        %p404 = pneg %p126
        %p405 = pneg %p150
        %p406 = pneg %p147
        %p407 = pneg %p171
        %p408 = pneg %p168
        %p409 = pneg %p192
        %p410 = pneg %p189
        %p411 = pneg %p213
        %p412 = pneg %p210
        %p413 = pneg %p234
        %p414 = pneg %p231
        %p415 = pneg %p262
        %p416 = pneg %p259
        %s417 = sand.u32 %s249, 1
        %s418 = scalar_lea.sflag [#allocation3], %s417
        %s419 = sand.u32 %s249, 1
        %s420 = smul.addr %s419, 16
        %s421 = scalar_lea.vmem [#allocation2], %s420
        %s422 = smul.u32 16, %s27
        %p423 = scmp.lt.s32.totalorder %s26, 1
        %s424 = scalar_select %p423, %s26, 1
        %p425 = scmp.lt.s32.totalorder %s422, 15
        %s426 = scalar_select %p425, %s422, 15
        %s427 = smul.addr %s426, 2
        %s428 = smul.addr %s424, 32
        %s429 = sadd.s32 %s427, %s428
        %s430 = smul.addr %s429, 8
        %s431 = scalar_lea.vmem %s0, %s430
        %s432 = smul.u32 16, %s27
        %s433 = smul.u32 %s27, 8
        %s434 = ssub.s32 %s433, 1
        %p435 = scmp.gt.s32.totalorder %s434, 0
        %s436 = scalar_select %p435, %s434, 0
        %s437 = smul.u32 2, %s436
        %p438 = scmp.lt.s32.totalorder %s26, 1
        %s439 = scalar_select %p438, %s26, 1
        %p440 = scmp.lt.s32.totalorder %s437, 15
        %s441 = scalar_select %p440, %s437, 15
        %s442 = smul.addr %s441, 2
        %s443 = smul.addr %s439, 32
        %s444 = sadd.s32 %s442, %s443
        %s445 = smul.addr %s444, 8
        %s446 = scalar_lea.vmem %s1, %s445
        %s447 = smul.u32 %s27, 8
        %s448 = ssub.s32 %s447, 1
        %p449 = scmp.gt.s32.totalorder %s448, 0
        %s450 = scalar_select %p449, %s448, 0
        %s451 = smul.u32 2, %s450
        %s452 = sadd.s32 %s27, 1
        %s453 = smul.u32 %s452, 8
        %p454 = scmp.lt.s32.totalorder %s453, 7
        %s455 = scalar_select %p454, %s453, 7
        %s456 = smul.u32 2, %s455
        %p457 = scmp.lt.s32.totalorder %s26, 1
        %s458 = scalar_select %p457, %s26, 1
        %p459 = scmp.lt.s32.totalorder %s456, 15
        %s460 = scalar_select %p459, %s456, 15
        %s461 = smul.addr %s460, 2
        %s462 = smul.addr %s458, 32
        %s463 = sadd.s32 %s461, %s462
        %s464 = smul.addr %s463, 8
        %s465 = scalar_lea.vmem %s2, %s464
        %s466 = sadd.s32 %s27, 1
        %s467 = smul.u32 %s466, 8
        %p468 = scmp.lt.s32.totalorder %s467, 7
        %s469 = scalar_select %p468, %s467, 7
        %s470 = smul.u32 2, %s469
        %s471 = smul.u32 2, %s27
        %s473 = smul.u32 %s27, 16
        %v474 = vld [vmem:[%s431] sm:$0xff]
        %v475 = vld [vmem:[%s431 + $0x8] sm:$0xff]
        %v476 = vld [vmem:[%s431 + $0x10] sm:$0xff]
        %v477 = vld [vmem:[%s431 + $0x18] sm:$0xff]
        %v478 = vld [vmem:[%s431 + $0x20] sm:$0xff]
        %v479 = vld [vmem:[%s431 + $0x28] sm:$0xff]
        %v480 = vld [vmem:[%s431 + $0x30] sm:$0xff]
        %v481 = vld [vmem:[%s431 + $0x38] sm:$0xff]
        %v482 = vld [vmem:[%s431 + $0x40] sm:$0xff]
        %v483 = vld [vmem:[%s431 + $0x48] sm:$0xff]
        %v484 = vld [vmem:[%s431 + $0x50] sm:$0xff]
        %v485 = vld [vmem:[%s431 + $0x58] sm:$0xff]
        %v486 = vld [vmem:[%s431 + $0x60] sm:$0xff]
        %v487 = vld [vmem:[%s431 + $0x68] sm:$0xff]
        %v488 = vld [vmem:[%s431 + $0x70] sm:$0xff]
        %v489 = vld [vmem:[%s431 + $0x78] sm:$0xff]
        %v490 = vld [vmem:[%s431 + $0x80] sm:$0xff]
        %v491 = vld [vmem:[%s431 + $0x88] sm:$0xff]
        %v492 = vld [vmem:[%s431 + $0x90] sm:$0xff]
        %v493 = vld [vmem:[%s431 + $0x98] sm:$0xff]
        %v494 = vld [vmem:[%s431 + $0xa0] sm:$0xff]
        %v495 = vld [vmem:[%s431 + $0xa8] sm:$0xff]
        %v496 = vld [vmem:[%s431 + $0xb0] sm:$0xff]
        %v497 = vld [vmem:[%s431 + $0xb8] sm:$0xff]
        %v498 = vld [vmem:[%s431 + $0xc0] sm:$0xff]
        %v499 = vld [vmem:[%s431 + $0xc8] sm:$0xff]
        %v500 = vld [vmem:[%s431 + $0xd0] sm:$0xff]
        %v501 = vld [vmem:[%s431 + $0xd8] sm:$0xff]
        %v502 = vld [vmem:[%s431 + $0xe0] sm:$0xff]
        %v503 = vld [vmem:[%s431 + $0xe8] sm:$0xff]
        %v504 = vld [vmem:[%s431 + $0xf0] sm:$0xff]
        %v505 = vld [vmem:[%s431 + $0xf8] sm:$0xff]
        %s506 = ssub.s32 %s473, 2
        %v507 = vstv %s506
        %v508 = vadd.s32 %v507, 1
        %vm509 = vcmp.ge.s32.totalorder %v507, 0
        %vm510 = vcmp.ge.s32.totalorder %v508, 0
        %v511 = vld [vmem:[%s446] sm:$0xff]
        %v512 = vld [vmem:[%s446 + $0x8] sm:$0xff]
        %v513 = vld [vmem:[%s446 + $0x10] sm:$0xff]
        %v514 = vld [vmem:[%s446 + $0x18] sm:$0xff]
        %v515 = vsel %vm509, 1, 0
        %v516 = vsel %vm510, 1, 0
        %vm517 = vcmp.eq.s32.totalorder %v515, 1
        %vm518 = vcmp.eq.s32.totalorder %v516, 1
        %v519 = vsel %vm517, %v511, 0.0
        %v520 = vsel %vm517, %v512, 0.0
        %v521 = vsel %vm518, %v513, 0.0
        %v522 = vsel %vm518, %v514, 0.0
        %s523 = sadd.s32 %s473, 16
        %v524 = vstv %s523
        %v525 = vadd.s32 %v524, 1
        %vm526 = vcmp.lt.s32.totalorder %v524, 16
        %vm527 = vcmp.lt.s32.totalorder %v525, 16
        %v528 = vld [vmem:[%s465] sm:$0xff]
        %v529 = vld [vmem:[%s465 + $0x8] sm:$0xff]
        %v530 = vld [vmem:[%s465 + $0x10] sm:$0xff]
        %v531 = vld [vmem:[%s465 + $0x18] sm:$0xff]
        %v532 = vsel %vm526, 1, 0
        %v533 = vsel %vm527, 1, 0
        %vm534 = vcmp.eq.s32.totalorder %v532, 1
        %vm535 = vcmp.eq.s32.totalorder %v533, 1
        %v536 = vsel %vm534, %v528, 0.0
        %v537 = vsel %vm534, %v529, 0.0
        %v538 = vsel %vm535, %v530, 0.0
        %v539 = vsel %vm535, %v531, 0.0
        %v540 = vld [vmem:[%s3] sm:$0xff]
        %v541 = vld [vmem:[%s3 + $0x8] sm:$0xff]
        %v542 = vld [vmem:[%s3 + $0x10] sm:$0xff]
        %v543 = vld [vmem:[%s3 + $0x18] sm:$0xff]
        %v544 = vld [vmem:[%s3 + $0x20] sm:$0xff]
        %v545 = vld [vmem:[%s3 + $0x28] sm:$0xff]
        %v546 = vld [vmem:[%s3 + $0x30] sm:$0xff]
        %v547 = vld [vmem:[%s3 + $0x38] sm:$0xff]
        %v548 = vld [vmem:[%s3 + $0x40] sm:$0xff]
        %v549 = vld [vmem:[%s3 + $0x48] sm:$0xff]
        %v550 = vld [vmem:[%s4] sm:$0x1f]
        %v551 = vmul.f32 %v544, %v474
        %v552 = vmul.f32 %v545, %v475
        %v553 = vmul.f32 %v544, %v476
        %v554 = vmul.f32 %v545, %v477
        %v555 = vmul.f32 %v544, %v478
        %v556 = vmul.f32 %v545, %v479
        %v557 = vmul.f32 %v544, %v480
        %v558 = vmul.f32 %v545, %v481
        %v559 = vmul.f32 %v544, %v482
        %v560 = vmul.f32 %v545, %v483
        %v561 = vmul.f32 %v544, %v484
        %v562 = vmul.f32 %v545, %v485
        %v563 = vmul.f32 %v544, %v486
        %v564 = vmul.f32 %v545, %v487
        %v565 = vmul.f32 %v544, %v488
        %v566 = vmul.f32 %v545, %v489
        %v567 = vmul.f32 %v544, %v490
        %v568 = vmul.f32 %v545, %v491
        %v569 = vmul.f32 %v544, %v492
        %v570 = vmul.f32 %v545, %v493
        %v571 = vmul.f32 %v544, %v494
        %v572 = vmul.f32 %v545, %v495
        %v573 = vmul.f32 %v544, %v496
        %v574 = vmul.f32 %v545, %v497
        %v575 = vmul.f32 %v544, %v498
        %v576 = vmul.f32 %v545, %v499
        %v577 = vmul.f32 %v544, %v500
        %v578 = vmul.f32 %v545, %v501
        %v579 = vmul.f32 %v544, %v502
        %v580 = vmul.f32 %v545, %v503
        %v581 = vmul.f32 %v544, %v504
        %v582 = vmul.f32 %v545, %v505
        %v583 = vrot.slane %v474, 6
        %v584 = vrot.slane %v476, 6
        %v585 = vrot.slane %v478, 6
        %v586 = vrot.slane %v480, 6
        %v587 = vrot.slane %v482, 6
        %v588 = vrot.slane %v484, 6
        %v589 = vrot.slane %v486, 6
        %v590 = vrot.slane %v488, 6
        %v591 = vrot.slane %v490, 6
        %v592 = vrot.slane %v492, 6
        %v593 = vrot.slane %v494, 6
        %v594 = vrot.slane %v496, 6
        %v595 = vrot.slane %v498, 6
        %v596 = vrot.slane %v500, 6
        %v597 = vrot.slane %v502, 6
        %v598 = vrot.slane %v504, 6
        %v599 = vrot.slane %v475, 6
        %v600 = vrot.slane %v477, 6
        %v601 = vrot.slane %v479, 6
        %v602 = vrot.slane %v481, 6
        %v603 = vrot.slane %v483, 6
        %v604 = vrot.slane %v485, 6
        %v605 = vrot.slane %v487, 6
        %v606 = vrot.slane %v489, 6
        %v607 = vrot.slane %v491, 6
        %v608 = vrot.slane %v493, 6
        %v609 = vrot.slane %v495, 6
        %v610 = vrot.slane %v497, 6
        %v611 = vrot.slane %v499, 6
        %v612 = vrot.slane %v501, 6
        %v613 = vrot.slane %v503, 6
        %v614 = vrot.slane %v505, 6
        %v615 = vlaneseq
        %v616 = vshrl.u32 %v615, 7
        %vm617 = vcmp.lt.s32.totalorder %v616, 2
        %v618 = vsel %vm617, %v583, %v599
        %v619 = vsel %vm617, %v584, %v600
        %v620 = vsel %vm617, %v585, %v601
        %v621 = vsel %vm617, %v586, %v602
        %v622 = vsel %vm617, %v587, %v603
        %v623 = vsel %vm617, %v588, %v604
        %v624 = vsel %vm617, %v589, %v605
        %v625 = vsel %vm617, %v590, %v606
        %v626 = vsel %vm617, %v591, %v607
        %v627 = vsel %vm617, %v592, %v608
        %v628 = vsel %vm617, %v593, %v609
        %v629 = vsel %vm617, %v594, %v610
        %v630 = vsel %vm617, %v595, %v611
        %v631 = vsel %vm617, %v596, %v612
        %v632 = vsel %vm617, %v597, %v613
        %v633 = vsel %vm617, %v598, %v614
        %v634 = vsel %vm617, %v599, %v583
        %v635 = vsel %vm617, %v600, %v584
        %v636 = vsel %vm617, %v601, %v585
        %v637 = vsel %vm617, %v602, %v586
        %v638 = vsel %vm617, %v603, %v587
        %v639 = vsel %vm617, %v604, %v588
        %v640 = vsel %vm617, %v605, %v589
        %v641 = vsel %vm617, %v606, %v590
        %v642 = vsel %vm617, %v607, %v591
        %v643 = vsel %vm617, %v608, %v592
        %v644 = vsel %vm617, %v609, %v593
        %v645 = vsel %vm617, %v610, %v594
        %v646 = vsel %vm617, %v611, %v595
        %v647 = vsel %vm617, %v612, %v596
        %v648 = vsel %vm617, %v613, %v597
        %v649 = vsel %vm617, %v614, %v598
        %v650 = vmul.f32 %v540, %v634
        %v651 = vmul.f32 %v541, %v618
        %v652 = vmul.f32 %v540, %v635
        %v653 = vmul.f32 %v541, %v619
        %v654 = vmul.f32 %v540, %v636
        %v655 = vmul.f32 %v541, %v620
        %v656 = vmul.f32 %v540, %v637
        %v657 = vmul.f32 %v541, %v621
        %v658 = vmul.f32 %v540, %v638
        %v659 = vmul.f32 %v541, %v622
        %v660 = vmul.f32 %v540, %v639
        %v661 = vmul.f32 %v541, %v623
        %v662 = vmul.f32 %v540, %v640
        %v663 = vmul.f32 %v541, %v624
        %v664 = vmul.f32 %v540, %v641
        %v665 = vmul.f32 %v541, %v625
        %v666 = vmul.f32 %v540, %v642
        %v667 = vmul.f32 %v541, %v626
        %v668 = vmul.f32 %v540, %v643
        %v669 = vmul.f32 %v541, %v627
        %v670 = vmul.f32 %v540, %v644
        %v671 = vmul.f32 %v541, %v628
        %v672 = vmul.f32 %v540, %v645
        %v673 = vmul.f32 %v541, %v629
        %v674 = vmul.f32 %v540, %v646
        %v675 = vmul.f32 %v541, %v630
        %v676 = vmul.f32 %v540, %v647
        %v677 = vmul.f32 %v541, %v631
        %v678 = vmul.f32 %v540, %v648
        %v679 = vmul.f32 %v541, %v632
        %v680 = vmul.f32 %v540, %v649
        %v681 = vmul.f32 %v541, %v633
        %v682 = vadd.f32 %v551, %v650
        %v683 = vadd.f32 %v552, %v651
        %v684 = vadd.f32 %v553, %v652
        %v685 = vadd.f32 %v554, %v653
        %v686 = vadd.f32 %v555, %v654
        %v687 = vadd.f32 %v556, %v655
        %v688 = vadd.f32 %v557, %v656
        %v689 = vadd.f32 %v558, %v657
        %v690 = vadd.f32 %v559, %v658
        %v691 = vadd.f32 %v560, %v659
        %v692 = vadd.f32 %v561, %v660
        %v693 = vadd.f32 %v562, %v661
        %v694 = vadd.f32 %v563, %v662
        %v695 = vadd.f32 %v564, %v663
        %v696 = vadd.f32 %v565, %v664
        %v697 = vadd.f32 %v566, %v665
        %v698 = vadd.f32 %v567, %v666
        %v699 = vadd.f32 %v568, %v667
        %v700 = vadd.f32 %v569, %v668
        %v701 = vadd.f32 %v570, %v669
        %v702 = vadd.f32 %v571, %v670
        %v703 = vadd.f32 %v572, %v671
        %v704 = vadd.f32 %v573, %v672
        %v705 = vadd.f32 %v574, %v673
        %v706 = vadd.f32 %v575, %v674
        %v707 = vadd.f32 %v576, %v675
        %v708 = vadd.f32 %v577, %v676
        %v709 = vadd.f32 %v578, %v677
        %v710 = vadd.f32 %v579, %v678
        %v711 = vadd.f32 %v580, %v679
        %v712 = vadd.f32 %v581, %v680
        %v713 = vadd.f32 %v582, %v681
        %v714 = vrot.slane %v474, 7
        %v715 = vrot.slane %v476, 7
        %v716 = vrot.slane %v478, 7
        %v717 = vrot.slane %v480, 7
        %v718 = vrot.slane %v482, 7
        %v719 = vrot.slane %v484, 7
        %v720 = vrot.slane %v486, 7
        %v721 = vrot.slane %v488, 7
        %v722 = vrot.slane %v490, 7
        %v723 = vrot.slane %v492, 7
        %v724 = vrot.slane %v494, 7
        %v725 = vrot.slane %v496, 7
        %v726 = vrot.slane %v498, 7
        %v727 = vrot.slane %v500, 7
        %v728 = vrot.slane %v502, 7
        %v729 = vrot.slane %v504, 7
        %v730 = vrot.slane %v475, 7
        %v731 = vrot.slane %v477, 7
        %v732 = vrot.slane %v479, 7
        %v733 = vrot.slane %v481, 7
        %v734 = vrot.slane %v483, 7
        %v735 = vrot.slane %v485, 7
        %v736 = vrot.slane %v487, 7
        %v737 = vrot.slane %v489, 7
        %v738 = vrot.slane %v491, 7
        %v739 = vrot.slane %v493, 7
        %v740 = vrot.slane %v495, 7
        %v741 = vrot.slane %v497, 7
        %v742 = vrot.slane %v499, 7
        %v743 = vrot.slane %v501, 7
        %v744 = vrot.slane %v503, 7
        %v745 = vrot.slane %v505, 7
        %vm746 = vcmp.lt.s32.totalorder %v616, 1
        %v747 = vsel %vm746, %v714, %v730
        %v748 = vsel %vm746, %v715, %v731
        %v749 = vsel %vm746, %v716, %v732
        %v750 = vsel %vm746, %v717, %v733
        %v751 = vsel %vm746, %v718, %v734
        %v752 = vsel %vm746, %v719, %v735
        %v753 = vsel %vm746, %v720, %v736
        %v754 = vsel %vm746, %v721, %v737
        %v755 = vsel %vm746, %v722, %v738
        %v756 = vsel %vm746, %v723, %v739
        %v757 = vsel %vm746, %v724, %v740
        %v758 = vsel %vm746, %v725, %v741
        %v759 = vsel %vm746, %v726, %v742
        %v760 = vsel %vm746, %v727, %v743
        %v761 = vsel %vm746, %v728, %v744
        %v762 = vsel %vm746, %v729, %v745
        %v763 = vsel %vm746, %v730, %v714
        %v764 = vsel %vm746, %v731, %v715
        %v765 = vsel %vm746, %v732, %v716
        %v766 = vsel %vm746, %v733, %v717
        %v767 = vsel %vm746, %v734, %v718
        %v768 = vsel %vm746, %v735, %v719
        %v769 = vsel %vm746, %v736, %v720
        %v770 = vsel %vm746, %v737, %v721
        %v771 = vsel %vm746, %v738, %v722
        %v772 = vsel %vm746, %v739, %v723
        %v773 = vsel %vm746, %v740, %v724
        %v774 = vsel %vm746, %v741, %v725
        %v775 = vsel %vm746, %v742, %v726
        %v776 = vsel %vm746, %v743, %v727
        %v777 = vsel %vm746, %v744, %v728
        %v778 = vsel %vm746, %v745, %v729
        %v779 = vmul.f32 %v542, %v763
        %v780 = vmul.f32 %v543, %v747
        %v781 = vmul.f32 %v542, %v764
        %v782 = vmul.f32 %v543, %v748
        %v783 = vmul.f32 %v542, %v765
        %v784 = vmul.f32 %v543, %v749
        %v785 = vmul.f32 %v542, %v766
        %v786 = vmul.f32 %v543, %v750
        %v787 = vmul.f32 %v542, %v767
        %v788 = vmul.f32 %v543, %v751
        %v789 = vmul.f32 %v542, %v768
        %v790 = vmul.f32 %v543, %v752
        %v791 = vmul.f32 %v542, %v769
        %v792 = vmul.f32 %v543, %v753
        %v793 = vmul.f32 %v542, %v770
        %v794 = vmul.f32 %v543, %v754
        %v795 = vmul.f32 %v542, %v771
        %v796 = vmul.f32 %v543, %v755
        %v797 = vmul.f32 %v542, %v772
        %v798 = vmul.f32 %v543, %v756
        %v799 = vmul.f32 %v542, %v773
        %v800 = vmul.f32 %v543, %v757
        %v801 = vmul.f32 %v542, %v774
        %v802 = vmul.f32 %v543, %v758
        %v803 = vmul.f32 %v542, %v775
        %v804 = vmul.f32 %v543, %v759
        %v805 = vmul.f32 %v542, %v776
        %v806 = vmul.f32 %v543, %v760
        %v807 = vmul.f32 %v542, %v777
        %v808 = vmul.f32 %v543, %v761
        %v809 = vmul.f32 %v542, %v778
        %v810 = vmul.f32 %v543, %v762
        %v811 = vadd.f32 %v682, %v779
        %v812 = vadd.f32 %v683, %v780
        %v813 = vadd.f32 %v684, %v781
        %v814 = vadd.f32 %v685, %v782
        %v815 = vadd.f32 %v686, %v783
        %v816 = vadd.f32 %v687, %v784
        %v817 = vadd.f32 %v688, %v785
        %v818 = vadd.f32 %v689, %v786
        %v819 = vadd.f32 %v690, %v787
        %v820 = vadd.f32 %v691, %v788
        %v821 = vadd.f32 %v692, %v789
        %v822 = vadd.f32 %v693, %v790
        %v823 = vadd.f32 %v694, %v791
        %v824 = vadd.f32 %v695, %v792
        %v825 = vadd.f32 %v696, %v793
        %v826 = vadd.f32 %v697, %v794
        %v827 = vadd.f32 %v698, %v795
        %v828 = vadd.f32 %v699, %v796
        %v829 = vadd.f32 %v700, %v797
        %v830 = vadd.f32 %v701, %v798
        %v831 = vadd.f32 %v702, %v799
        %v832 = vadd.f32 %v703, %v800
        %v833 = vadd.f32 %v704, %v801
        %v834 = vadd.f32 %v705, %v802
        %v835 = vadd.f32 %v706, %v803
        %v836 = vadd.f32 %v707, %v804
        %v837 = vadd.f32 %v708, %v805
        %v838 = vadd.f32 %v709, %v806
        %v839 = vadd.f32 %v710, %v807
        %v840 = vadd.f32 %v711, %v808
        %v841 = vadd.f32 %v712, %v809
        %v842 = vadd.f32 %v713, %v810
        %v843 = vrot.slane %v474, 1
        %v844 = vrot.slane %v476, 1
        %v845 = vrot.slane %v478, 1
        %v846 = vrot.slane %v480, 1
        %v847 = vrot.slane %v482, 1
        %v848 = vrot.slane %v484, 1
        %v849 = vrot.slane %v486, 1
        %v850 = vrot.slane %v488, 1
        %v851 = vrot.slane %v490, 1
        %v852 = vrot.slane %v492, 1
        %v853 = vrot.slane %v494, 1
        %v854 = vrot.slane %v496, 1
        %v855 = vrot.slane %v498, 1
        %v856 = vrot.slane %v500, 1
        %v857 = vrot.slane %v502, 1
        %v858 = vrot.slane %v504, 1
        %v859 = vrot.slane %v475, 1
        %v860 = vrot.slane %v477, 1
        %v861 = vrot.slane %v479, 1
        %v862 = vrot.slane %v481, 1
        %v863 = vrot.slane %v483, 1
        %v864 = vrot.slane %v485, 1
        %v865 = vrot.slane %v487, 1
        %v866 = vrot.slane %v489, 1
        %v867 = vrot.slane %v491, 1
        %v868 = vrot.slane %v493, 1
        %v869 = vrot.slane %v495, 1
        %v870 = vrot.slane %v497, 1
        %v871 = vrot.slane %v499, 1
        %v872 = vrot.slane %v501, 1
        %v873 = vrot.slane %v503, 1
        %v874 = vrot.slane %v505, 1
        %vm875 = vcmp.lt.s32.totalorder %v616, 7
        %v876 = vsel %vm875, %v843, %v859
        %v877 = vsel %vm875, %v844, %v860
        %v878 = vsel %vm875, %v845, %v861
        %v879 = vsel %vm875, %v846, %v862
        %v880 = vsel %vm875, %v847, %v863
        %v881 = vsel %vm875, %v848, %v864
        %v882 = vsel %vm875, %v849, %v865
        %v883 = vsel %vm875, %v850, %v866
        %v884 = vsel %vm875, %v851, %v867
        %v885 = vsel %vm875, %v852, %v868
        %v886 = vsel %vm875, %v853, %v869
        %v887 = vsel %vm875, %v854, %v870
        %v888 = vsel %vm875, %v855, %v871
        %v889 = vsel %vm875, %v856, %v872
        %v890 = vsel %vm875, %v857, %v873
        %v891 = vsel %vm875, %v858, %v874
        %v892 = vsel %vm875, %v859, %v843
        %v893 = vsel %vm875, %v860, %v844
        %v894 = vsel %vm875, %v861, %v845
        %v895 = vsel %vm875, %v862, %v846
        %v896 = vsel %vm875, %v863, %v847
        %v897 = vsel %vm875, %v864, %v848
        %v898 = vsel %vm875, %v865, %v849
        %v899 = vsel %vm875, %v866, %v850
        %v900 = vsel %vm875, %v867, %v851
        %v901 = vsel %vm875, %v868, %v852
        %v902 = vsel %vm875, %v869, %v853
        %v903 = vsel %vm875, %v870, %v854
        %v904 = vsel %vm875, %v871, %v855
        %v905 = vsel %vm875, %v872, %v856
        %v906 = vsel %vm875, %v873, %v857
        %v907 = vsel %vm875, %v874, %v858
        %v908 = vmul.f32 %v546, %v876
        %v909 = vmul.f32 %v547, %v892
        %v910 = vmul.f32 %v546, %v877
        %v911 = vmul.f32 %v547, %v893
        %v912 = vmul.f32 %v546, %v878
        %v913 = vmul.f32 %v547, %v894
        %v914 = vmul.f32 %v546, %v879
        %v915 = vmul.f32 %v547, %v895
        %v916 = vmul.f32 %v546, %v880
        %v917 = vmul.f32 %v547, %v896
        %v918 = vmul.f32 %v546, %v881
        %v919 = vmul.f32 %v547, %v897
        %v920 = vmul.f32 %v546, %v882
        %v921 = vmul.f32 %v547, %v898
        %v922 = vmul.f32 %v546, %v883
        %v923 = vmul.f32 %v547, %v899
        %v924 = vmul.f32 %v546, %v884
        %v925 = vmul.f32 %v547, %v900
        %v926 = vmul.f32 %v546, %v885
        %v927 = vmul.f32 %v547, %v901
        %v928 = vmul.f32 %v546, %v886
        %v929 = vmul.f32 %v547, %v902
        %v930 = vmul.f32 %v546, %v887
        %v931 = vmul.f32 %v547, %v903
        %v932 = vmul.f32 %v546, %v888
        %v933 = vmul.f32 %v547, %v904
        %v934 = vmul.f32 %v546, %v889
        %v935 = vmul.f32 %v547, %v905
        %v936 = vmul.f32 %v546, %v890
        %v937 = vmul.f32 %v547, %v906
        %v938 = vmul.f32 %v546, %v891
        %v939 = vmul.f32 %v547, %v907
        %v940 = vadd.f32 %v811, %v908
        %v941 = vadd.f32 %v812, %v909
        %v942 = vadd.f32 %v813, %v910
        %v943 = vadd.f32 %v814, %v911
        %v944 = vadd.f32 %v815, %v912
        %v945 = vadd.f32 %v816, %v913
        %v946 = vadd.f32 %v817, %v914
        %v947 = vadd.f32 %v818, %v915
        %v948 = vadd.f32 %v819, %v916
        %v949 = vadd.f32 %v820, %v917
        %v950 = vadd.f32 %v821, %v918
        %v951 = vadd.f32 %v822, %v919
        %v952 = vadd.f32 %v823, %v920
        %v953 = vadd.f32 %v824, %v921
        %v954 = vadd.f32 %v825, %v922
        %v955 = vadd.f32 %v826, %v923
        %v956 = vadd.f32 %v827, %v924
        %v957 = vadd.f32 %v828, %v925
        %v958 = vadd.f32 %v829, %v926
        %v959 = vadd.f32 %v830, %v927
        %v960 = vadd.f32 %v831, %v928
        %v961 = vadd.f32 %v832, %v929
        %v962 = vadd.f32 %v833, %v930
        %v963 = vadd.f32 %v834, %v931
        %v964 = vadd.f32 %v835, %v932
        %v965 = vadd.f32 %v836, %v933
        %v966 = vadd.f32 %v837, %v934
        %v967 = vadd.f32 %v838, %v935
        %v968 = vadd.f32 %v839, %v936
        %v969 = vadd.f32 %v840, %v937
        %v970 = vadd.f32 %v841, %v938
        %v971 = vadd.f32 %v842, %v939
        %v972 = vrot.slane %v474, 2
        %v973 = vrot.slane %v476, 2
        %v974 = vrot.slane %v478, 2
        %v975 = vrot.slane %v480, 2
        %v976 = vrot.slane %v482, 2
        %v977 = vrot.slane %v484, 2
        %v978 = vrot.slane %v486, 2
        %v979 = vrot.slane %v488, 2
        %v980 = vrot.slane %v490, 2
        %v981 = vrot.slane %v492, 2
        %v982 = vrot.slane %v494, 2
        %v983 = vrot.slane %v496, 2
        %v984 = vrot.slane %v498, 2
        %v985 = vrot.slane %v500, 2
        %v986 = vrot.slane %v502, 2
        %v987 = vrot.slane %v504, 2
        %v988 = vrot.slane %v475, 2
        %v989 = vrot.slane %v477, 2
        %v990 = vrot.slane %v479, 2
        %v991 = vrot.slane %v481, 2
        %v992 = vrot.slane %v483, 2
        %v993 = vrot.slane %v485, 2
        %v994 = vrot.slane %v487, 2
        %v995 = vrot.slane %v489, 2
        %v996 = vrot.slane %v491, 2
        %v997 = vrot.slane %v493, 2
        %v998 = vrot.slane %v495, 2
        %v999 = vrot.slane %v497, 2
        %v1000 = vrot.slane %v499, 2
        %v1001 = vrot.slane %v501, 2
        %v1002 = vrot.slane %v503, 2
        %v1003 = vrot.slane %v505, 2
        %vm1004 = vcmp.lt.s32.totalorder %v616, 6
        %v1005 = vsel %vm1004, %v972, %v988
        %v1006 = vsel %vm1004, %v973, %v989
        %v1007 = vsel %vm1004, %v974, %v990
        %v1008 = vsel %vm1004, %v975, %v991
        %v1009 = vsel %vm1004, %v976, %v992
        %v1010 = vsel %vm1004, %v977, %v993
        %v1011 = vsel %vm1004, %v978, %v994
        %v1012 = vsel %vm1004, %v979, %v995
        %v1013 = vsel %vm1004, %v980, %v996
        %v1014 = vsel %vm1004, %v981, %v997
        %v1015 = vsel %vm1004, %v982, %v998
        %v1016 = vsel %vm1004, %v983, %v999
        %v1017 = vsel %vm1004, %v984, %v1000
        %v1018 = vsel %vm1004, %v985, %v1001
        %v1019 = vsel %vm1004, %v986, %v1002
        %v1020 = vsel %vm1004, %v987, %v1003
        %v1021 = vsel %vm1004, %v988, %v972
        %v1022 = vsel %vm1004, %v989, %v973
        %v1023 = vsel %vm1004, %v990, %v974
        %v1024 = vsel %vm1004, %v991, %v975
        %v1025 = vsel %vm1004, %v992, %v976
        %v1026 = vsel %vm1004, %v993, %v977
        %v1027 = vsel %vm1004, %v994, %v978
        %v1028 = vsel %vm1004, %v995, %v979
        %v1029 = vsel %vm1004, %v996, %v980
        %v1030 = vsel %vm1004, %v997, %v981
        %v1031 = vsel %vm1004, %v998, %v982
        %v1032 = vsel %vm1004, %v999, %v983
        %v1033 = vsel %vm1004, %v1000, %v984
        %v1034 = vsel %vm1004, %v1001, %v985
        %v1035 = vsel %vm1004, %v1002, %v986
        %v1036 = vsel %vm1004, %v1003, %v987
        %v1037 = vmul.f32 %v548, %v1005
        %v1038 = vmul.f32 %v549, %v1021
        %v1039 = vmul.f32 %v548, %v1006
        %v1040 = vmul.f32 %v549, %v1022
        %v1041 = vmul.f32 %v548, %v1007
        %v1042 = vmul.f32 %v549, %v1023
        %v1043 = vmul.f32 %v548, %v1008
        %v1044 = vmul.f32 %v549, %v1024
        %v1045 = vmul.f32 %v548, %v1009
        %v1046 = vmul.f32 %v549, %v1025
        %v1047 = vmul.f32 %v548, %v1010
        %v1048 = vmul.f32 %v549, %v1026
        %v1049 = vmul.f32 %v548, %v1011
        %v1050 = vmul.f32 %v549, %v1027
        %v1051 = vmul.f32 %v548, %v1012
        %v1052 = vmul.f32 %v549, %v1028
        %v1053 = vmul.f32 %v548, %v1013
        %v1054 = vmul.f32 %v549, %v1029
        %v1055 = vmul.f32 %v548, %v1014
        %v1056 = vmul.f32 %v549, %v1030
        %v1057 = vmul.f32 %v548, %v1015
        %v1058 = vmul.f32 %v549, %v1031
        %v1059 = vmul.f32 %v548, %v1016
        %v1060 = vmul.f32 %v549, %v1032
        %v1061 = vmul.f32 %v548, %v1017
        %v1062 = vmul.f32 %v549, %v1033
        %v1063 = vmul.f32 %v548, %v1018
        %v1064 = vmul.f32 %v549, %v1034
        %v1065 = vmul.f32 %v548, %v1019
        %v1066 = vmul.f32 %v549, %v1035
        %v1067 = vmul.f32 %v548, %v1020
        %v1068 = vmul.f32 %v549, %v1036
        %v1069 = vadd.f32 %v940, %v1037
        %v1070 = vadd.f32 %v941, %v1038
        %v1071 = vadd.f32 %v942, %v1039
        %v1072 = vadd.f32 %v943, %v1040
        %v1073 = vadd.f32 %v944, %v1041
        %v1074 = vadd.f32 %v945, %v1042
        %v1075 = vadd.f32 %v946, %v1043
        %v1076 = vadd.f32 %v947, %v1044
        %v1077 = vadd.f32 %v948, %v1045
        %v1078 = vadd.f32 %v949, %v1046
        %v1079 = vadd.f32 %v950, %v1047
        %v1080 = vadd.f32 %v951, %v1048
        %v1081 = vadd.f32 %v952, %v1049
        %v1082 = vadd.f32 %v953, %v1050
        %v1083 = vadd.f32 %v954, %v1051
        %v1084 = vadd.f32 %v955, %v1052
        %v1085 = vadd.f32 %v956, %v1053
        %v1086 = vadd.f32 %v957, %v1054
        %v1087 = vadd.f32 %v958, %v1055
        %v1088 = vadd.f32 %v959, %v1056
        %v1089 = vadd.f32 %v960, %v1057
        %v1090 = vadd.f32 %v961, %v1058
        %v1091 = vadd.f32 %v962, %v1059
        %v1092 = vadd.f32 %v963, %v1060
        %v1093 = vadd.f32 %v964, %v1061
        %v1094 = vadd.f32 %v965, %v1062
        %v1095 = vadd.f32 %v966, %v1063
        %v1096 = vadd.f32 %v967, %v1064
        %v1097 = vadd.f32 %v968, %v1065
        %v1098 = vadd.f32 %v969, %v1066
        %v1099 = vadd.f32 %v970, %v1067
        %v1100 = vadd.f32 %v971, %v1068
        %v1101 = vlaneseq
        %v1102 = vshrl.u32 %v1101, 7
        %v1103 = vsub.s32 0, %v1102
        %v1104 = vrot.slane %v550, %v1103
        %v1105 = vmul.f32 %v1104, %v519
        %v1106 = vmul.f32 %v1104, %v520
        %v1107 = vmul.f32 %v1104, %v521
        %v1108 = vmul.f32 %v1104, %v522
        %v1109 = vmul.f32 %v1104, %v474
        %v1110 = vmul.f32 %v1104, %v475
        %v1111 = vmul.f32 %v1104, %v476
        %v1112 = vmul.f32 %v1104, %v477
        %v1113 = vmul.f32 %v1104, %v478
        %v1114 = vmul.f32 %v1104, %v479
        %v1115 = vmul.f32 %v1104, %v480
        %v1116 = vmul.f32 %v1104, %v481
        %v1117 = vmul.f32 %v1104, %v482
        %v1118 = vmul.f32 %v1104, %v483
        %v1119 = vmul.f32 %v1104, %v484
        %v1120 = vmul.f32 %v1104, %v485
        %v1121 = vmul.f32 %v1104, %v486
        %v1122 = vmul.f32 %v1104, %v487
        %v1123 = vmul.f32 %v1104, %v488
        %v1124 = vmul.f32 %v1104, %v489
        %v1125 = vmul.f32 %v1104, %v490
        %v1126 = vmul.f32 %v1104, %v491
        %v1127 = vmul.f32 %v1104, %v492
        %v1128 = vmul.f32 %v1104, %v493
        %v1129 = vmul.f32 %v1104, %v494
        %v1130 = vmul.f32 %v1104, %v495
        %v1131 = vmul.f32 %v1104, %v496
        %v1132 = vmul.f32 %v1104, %v497
        %v1133 = vmul.f32 %v1104, %v498
        %v1134 = vmul.f32 %v1104, %v499
        %v1135 = vmul.f32 %v1104, %v500
        %v1136 = vmul.f32 %v1104, %v501
        %v1137 = vadd.f32 %v1069, %v1105
        %v1138 = vadd.f32 %v1070, %v1106
        %v1139 = vadd.f32 %v1071, %v1107
        %v1140 = vadd.f32 %v1072, %v1108
        %v1141 = vadd.f32 %v1073, %v1109
        %v1142 = vadd.f32 %v1074, %v1110
        %v1143 = vadd.f32 %v1075, %v1111
        %v1144 = vadd.f32 %v1076, %v1112
        %v1145 = vadd.f32 %v1077, %v1113
        %v1146 = vadd.f32 %v1078, %v1114
        %v1147 = vadd.f32 %v1079, %v1115
        %v1148 = vadd.f32 %v1080, %v1116
        %v1149 = vadd.f32 %v1081, %v1117
        %v1150 = vadd.f32 %v1082, %v1118
        %v1151 = vadd.f32 %v1083, %v1119
        %v1152 = vadd.f32 %v1084, %v1120
        %v1153 = vadd.f32 %v1085, %v1121
        %v1154 = vadd.f32 %v1086, %v1122
        %v1155 = vadd.f32 %v1087, %v1123
        %v1156 = vadd.f32 %v1088, %v1124
        %v1157 = vadd.f32 %v1089, %v1125
        %v1158 = vadd.f32 %v1090, %v1126
        %v1159 = vadd.f32 %v1091, %v1127
        %v1160 = vadd.f32 %v1092, %v1128
        %v1161 = vadd.f32 %v1093, %v1129
        %v1162 = vadd.f32 %v1094, %v1130
        %v1163 = vadd.f32 %v1095, %v1131
        %v1164 = vadd.f32 %v1096, %v1132
        %v1165 = vadd.f32 %v1097, %v1133
        %v1166 = vadd.f32 %v1098, %v1134
        %v1167 = vadd.f32 %v1099, %v1135
        %v1168 = vadd.f32 %v1100, %v1136
        %v1169 = vlaneseq
        %v1170 = vshrl.u32 %v1169, 7
        %v1171 = vsub.s32 1, %v1170
        %v1172 = vrot.slane %v550, %v1171
        %v1173 = vmul.f32 %v1172, %v521
        %v1174 = vmul.f32 %v1172, %v522
        %v1175 = vmul.f32 %v1172, %v474
        %v1176 = vmul.f32 %v1172, %v475
        %v1177 = vmul.f32 %v1172, %v476
        %v1178 = vmul.f32 %v1172, %v477
        %v1179 = vmul.f32 %v1172, %v478
        %v1180 = vmul.f32 %v1172, %v479
        %v1181 = vmul.f32 %v1172, %v480
        %v1182 = vmul.f32 %v1172, %v481
        %v1183 = vmul.f32 %v1172, %v482
        %v1184 = vmul.f32 %v1172, %v483
        %v1185 = vmul.f32 %v1172, %v484
        %v1186 = vmul.f32 %v1172, %v485
        %v1187 = vmul.f32 %v1172, %v486
        %v1188 = vmul.f32 %v1172, %v487
        %v1189 = vmul.f32 %v1172, %v488
        %v1190 = vmul.f32 %v1172, %v489
        %v1191 = vmul.f32 %v1172, %v490
        %v1192 = vmul.f32 %v1172, %v491
        %v1193 = vmul.f32 %v1172, %v492
        %v1194 = vmul.f32 %v1172, %v493
        %v1195 = vmul.f32 %v1172, %v494
        %v1196 = vmul.f32 %v1172, %v495
        %v1197 = vmul.f32 %v1172, %v496
        %v1198 = vmul.f32 %v1172, %v497
        %v1199 = vmul.f32 %v1172, %v498
        %v1200 = vmul.f32 %v1172, %v499
        %v1201 = vmul.f32 %v1172, %v500
        %v1202 = vmul.f32 %v1172, %v501
        %v1203 = vmul.f32 %v1172, %v502
        %v1204 = vmul.f32 %v1172, %v503
        %v1205 = vadd.f32 %v1137, %v1173
        %v1206 = vadd.f32 %v1138, %v1174
        %v1207 = vadd.f32 %v1139, %v1175
        %v1208 = vadd.f32 %v1140, %v1176
        %v1209 = vadd.f32 %v1141, %v1177
        %v1210 = vadd.f32 %v1142, %v1178
        %v1211 = vadd.f32 %v1143, %v1179
        %v1212 = vadd.f32 %v1144, %v1180
        %v1213 = vadd.f32 %v1145, %v1181
        %v1214 = vadd.f32 %v1146, %v1182
        %v1215 = vadd.f32 %v1147, %v1183
        %v1216 = vadd.f32 %v1148, %v1184
        %v1217 = vadd.f32 %v1149, %v1185
        %v1218 = vadd.f32 %v1150, %v1186
        %v1219 = vadd.f32 %v1151, %v1187
        %v1220 = vadd.f32 %v1152, %v1188
        %v1221 = vadd.f32 %v1153, %v1189
        %v1222 = vadd.f32 %v1154, %v1190
        %v1223 = vadd.f32 %v1155, %v1191
        %v1224 = vadd.f32 %v1156, %v1192
        %v1225 = vadd.f32 %v1157, %v1193
        %v1226 = vadd.f32 %v1158, %v1194
        %v1227 = vadd.f32 %v1159, %v1195
        %v1228 = vadd.f32 %v1160, %v1196
        %v1229 = vadd.f32 %v1161, %v1197
        %v1230 = vadd.f32 %v1162, %v1198
        %v1231 = vadd.f32 %v1163, %v1199
        %v1232 = vadd.f32 %v1164, %v1200
        %v1233 = vadd.f32 %v1165, %v1201
        %v1234 = vadd.f32 %v1166, %v1202
        %v1235 = vadd.f32 %v1167, %v1203
        %v1236 = vadd.f32 %v1168, %v1204
        %v1237 = vlaneseq
        %v1238 = vshrl.u32 %v1237, 7
        %v1239 = vsub.s32 2, %v1238
        %v1240 = vrot.slane %v550, %v1239
        %v1241 = vmul.f32 %v1240, %v474
        %v1242 = vmul.f32 %v1240, %v475
        %v1243 = vmul.f32 %v1240, %v476
        %v1244 = vmul.f32 %v1240, %v477
        %v1245 = vmul.f32 %v1240, %v478
        %v1246 = vmul.f32 %v1240, %v479
        %v1247 = vmul.f32 %v1240, %v480
        %v1248 = vmul.f32 %v1240, %v481
        %v1249 = vmul.f32 %v1240, %v482
        %v1250 = vmul.f32 %v1240, %v483
        %v1251 = vmul.f32 %v1240, %v484
        %v1252 = vmul.f32 %v1240, %v485
        %v1253 = vmul.f32 %v1240, %v486
        %v1254 = vmul.f32 %v1240, %v487
        %v1255 = vmul.f32 %v1240, %v488
        %v1256 = vmul.f32 %v1240, %v489
        %v1257 = vmul.f32 %v1240, %v490
        %v1258 = vmul.f32 %v1240, %v491
        %v1259 = vmul.f32 %v1240, %v492
        %v1260 = vmul.f32 %v1240, %v493
        %v1261 = vmul.f32 %v1240, %v494
        %v1262 = vmul.f32 %v1240, %v495
        %v1263 = vmul.f32 %v1240, %v496
        %v1264 = vmul.f32 %v1240, %v497
        %v1265 = vmul.f32 %v1240, %v498
        %v1266 = vmul.f32 %v1240, %v499
        %v1267 = vmul.f32 %v1240, %v500
        %v1268 = vmul.f32 %v1240, %v501
        %v1269 = vmul.f32 %v1240, %v502
        %v1270 = vmul.f32 %v1240, %v503
        %v1271 = vmul.f32 %v1240, %v504
        %v1272 = vmul.f32 %v1240, %v505
        %v1273 = vadd.f32 %v1205, %v1241
        %v1274 = vadd.f32 %v1206, %v1242
        %v1275 = vadd.f32 %v1207, %v1243
        %v1276 = vadd.f32 %v1208, %v1244
        %v1277 = vadd.f32 %v1209, %v1245
        %v1278 = vadd.f32 %v1210, %v1246
        %v1279 = vadd.f32 %v1211, %v1247
        %v1280 = vadd.f32 %v1212, %v1248
        %v1281 = vadd.f32 %v1213, %v1249
        %v1282 = vadd.f32 %v1214, %v1250
        %v1283 = vadd.f32 %v1215, %v1251
        %v1284 = vadd.f32 %v1216, %v1252
        %v1285 = vadd.f32 %v1217, %v1253
        %v1286 = vadd.f32 %v1218, %v1254
        %v1287 = vadd.f32 %v1219, %v1255
        %v1288 = vadd.f32 %v1220, %v1256
        %v1289 = vadd.f32 %v1221, %v1257
        %v1290 = vadd.f32 %v1222, %v1258
        %v1291 = vadd.f32 %v1223, %v1259
        %v1292 = vadd.f32 %v1224, %v1260
        %v1293 = vadd.f32 %v1225, %v1261
        %v1294 = vadd.f32 %v1226, %v1262
        %v1295 = vadd.f32 %v1227, %v1263
        %v1296 = vadd.f32 %v1228, %v1264
        %v1297 = vadd.f32 %v1229, %v1265
        %v1298 = vadd.f32 %v1230, %v1266
        %v1299 = vadd.f32 %v1231, %v1267
        %v1300 = vadd.f32 %v1232, %v1268
        %v1301 = vadd.f32 %v1233, %v1269
        %v1302 = vadd.f32 %v1234, %v1270
        %v1303 = vadd.f32 %v1235, %v1271
        %v1304 = vadd.f32 %v1236, %v1272
        %v1305 = vlaneseq
        %v1306 = vshrl.u32 %v1305, 7
        %v1307 = vsub.s32 3, %v1306
        %v1308 = vrot.slane %v550, %v1307
        %v1309 = vmul.f32 %v1308, %v476
        %v1310 = vmul.f32 %v1308, %v477
        %v1311 = vmul.f32 %v1308, %v478
        %v1312 = vmul.f32 %v1308, %v479
        %v1313 = vmul.f32 %v1308, %v480
        %v1314 = vmul.f32 %v1308, %v481
        %v1315 = vmul.f32 %v1308, %v482
        %v1316 = vmul.f32 %v1308, %v483
        %v1317 = vmul.f32 %v1308, %v484
        %v1318 = vmul.f32 %v1308, %v485
        %v1319 = vmul.f32 %v1308, %v486
        %v1320 = vmul.f32 %v1308, %v487
        %v1321 = vmul.f32 %v1308, %v488
        %v1322 = vmul.f32 %v1308, %v489
        %v1323 = vmul.f32 %v1308, %v490
        %v1324 = vmul.f32 %v1308, %v491
        %v1325 = vmul.f32 %v1308, %v492
        %v1326 = vmul.f32 %v1308, %v493
        %v1327 = vmul.f32 %v1308, %v494
        %v1328 = vmul.f32 %v1308, %v495
        %v1329 = vmul.f32 %v1308, %v496
        %v1330 = vmul.f32 %v1308, %v497
        %v1331 = vmul.f32 %v1308, %v498
        %v1332 = vmul.f32 %v1308, %v499
        %v1333 = vmul.f32 %v1308, %v500
        %v1334 = vmul.f32 %v1308, %v501
        %v1335 = vmul.f32 %v1308, %v502
        %v1336 = vmul.f32 %v1308, %v503
        %v1337 = vmul.f32 %v1308, %v504
        %v1338 = vmul.f32 %v1308, %v505
        %v1339 = vmul.f32 %v1308, %v536
        %v1340 = vmul.f32 %v1308, %v537
        %v1341 = vadd.f32 %v1273, %v1309
        %v1342 = vadd.f32 %v1274, %v1310
        %v1343 = vadd.f32 %v1275, %v1311
        %v1344 = vadd.f32 %v1276, %v1312
        %v1345 = vadd.f32 %v1277, %v1313
        %v1346 = vadd.f32 %v1278, %v1314
        %v1347 = vadd.f32 %v1279, %v1315
        %v1348 = vadd.f32 %v1280, %v1316
        %v1349 = vadd.f32 %v1281, %v1317
        %v1350 = vadd.f32 %v1282, %v1318
        %v1351 = vadd.f32 %v1283, %v1319
        %v1352 = vadd.f32 %v1284, %v1320
        %v1353 = vadd.f32 %v1285, %v1321
        %v1354 = vadd.f32 %v1286, %v1322
        %v1355 = vadd.f32 %v1287, %v1323
        %v1356 = vadd.f32 %v1288, %v1324
        %v1357 = vadd.f32 %v1289, %v1325
        %v1358 = vadd.f32 %v1290, %v1326
        %v1359 = vadd.f32 %v1291, %v1327
        %v1360 = vadd.f32 %v1292, %v1328
        %v1361 = vadd.f32 %v1293, %v1329
        %v1362 = vadd.f32 %v1294, %v1330
        %v1363 = vadd.f32 %v1295, %v1331
        %v1364 = vadd.f32 %v1296, %v1332
        %v1365 = vadd.f32 %v1297, %v1333
        %v1366 = vadd.f32 %v1298, %v1334
        %v1367 = vadd.f32 %v1299, %v1335
        %v1368 = vadd.f32 %v1300, %v1336
        %v1369 = vadd.f32 %v1301, %v1337
        %v1370 = vadd.f32 %v1302, %v1338
        %v1371 = vadd.f32 %v1303, %v1339
        %v1372 = vadd.f32 %v1304, %v1340
        %v1373 = vlaneseq
        %v1374 = vshrl.u32 %v1373, 7
        %v1375 = vsub.s32 4, %v1374
        %v1376 = vrot.slane %v550, %v1375
        %v1377 = vmul.f32 %v1376, %v478
        %v1378 = vmul.f32 %v1376, %v479
        %v1379 = vmul.f32 %v1376, %v480
        %v1380 = vmul.f32 %v1376, %v481
        %v1381 = vmul.f32 %v1376, %v482
        %v1382 = vmul.f32 %v1376, %v483
        %v1383 = vmul.f32 %v1376, %v484
        %v1384 = vmul.f32 %v1376, %v485
        %v1385 = vmul.f32 %v1376, %v486
        %v1386 = vmul.f32 %v1376, %v487
        %v1387 = vmul.f32 %v1376, %v488
        %v1388 = vmul.f32 %v1376, %v489
        %v1389 = vmul.f32 %v1376, %v490
        %v1390 = vmul.f32 %v1376, %v491
        %v1391 = vmul.f32 %v1376, %v492
        %v1392 = vmul.f32 %v1376, %v493
        %v1393 = vmul.f32 %v1376, %v494
        %v1394 = vmul.f32 %v1376, %v495
        %v1395 = vmul.f32 %v1376, %v496
        %v1396 = vmul.f32 %v1376, %v497
        %v1397 = vmul.f32 %v1376, %v498
        %v1398 = vmul.f32 %v1376, %v499
        %v1399 = vmul.f32 %v1376, %v500
        %v1400 = vmul.f32 %v1376, %v501
        %v1401 = vmul.f32 %v1376, %v502
        %v1402 = vmul.f32 %v1376, %v503
        %v1403 = vmul.f32 %v1376, %v504
        %v1404 = vmul.f32 %v1376, %v505
        %v1405 = vmul.f32 %v1376, %v536
        %v1406 = vmul.f32 %v1376, %v537
        %v1407 = vmul.f32 %v1376, %v538
        %v1408 = vmul.f32 %v1376, %v539
        %v1409 = vadd.f32 %v1341, %v1377
        %v1410 = vadd.f32 %v1342, %v1378
        %v1411 = vadd.f32 %v1343, %v1379
        %v1412 = vadd.f32 %v1344, %v1380
        %v1413 = vadd.f32 %v1345, %v1381
        %v1414 = vadd.f32 %v1346, %v1382
        %v1415 = vadd.f32 %v1347, %v1383
        %v1416 = vadd.f32 %v1348, %v1384
        %v1417 = vadd.f32 %v1349, %v1385
        %v1418 = vadd.f32 %v1350, %v1386
        %v1419 = vadd.f32 %v1351, %v1387
        %v1420 = vadd.f32 %v1352, %v1388
        %v1421 = vadd.f32 %v1353, %v1389
        %v1422 = vadd.f32 %v1354, %v1390
        %v1423 = vadd.f32 %v1355, %v1391
        %v1424 = vadd.f32 %v1356, %v1392
        %v1425 = vadd.f32 %v1357, %v1393
        %v1426 = vadd.f32 %v1358, %v1394
        %v1427 = vadd.f32 %v1359, %v1395
        %v1428 = vadd.f32 %v1360, %v1396
        %v1429 = vadd.f32 %v1361, %v1397
        %v1430 = vadd.f32 %v1362, %v1398
        %v1431 = vadd.f32 %v1363, %v1399
        %v1432 = vadd.f32 %v1364, %v1400
        %v1433 = vadd.f32 %v1365, %v1401
        %v1434 = vadd.f32 %v1366, %v1402
        %v1435 = vadd.f32 %v1367, %v1403
        %v1436 = vadd.f32 %v1368, %v1404
        %v1437 = vadd.f32 %v1369, %v1405
        %v1438 = vadd.f32 %v1370, %v1406
        %v1439 = vadd.f32 %v1371, %v1407
        %v1440 = vadd.f32 %v1372, %v1408
        %v1441 = vld [vmem:[%s5] sm:$0x1]
        %v1443 = vlaneseq
        %v1444 = vshrl.u32 %v1443, 7
        %v1445 = vsub.s32 0, %v1444
        %v1446 = vrot.slane %v1441, %v1445
        %v1448 = vadd.f32 %v1409, %v1446
        %v1449 = vadd.f32 %v1410, %v1446
        %v1450 = vadd.f32 %v1411, %v1446
        %v1451 = vadd.f32 %v1412, %v1446
        %v1452 = vadd.f32 %v1413, %v1446
        %v1453 = vadd.f32 %v1414, %v1446
        %v1454 = vadd.f32 %v1415, %v1446
        %v1455 = vadd.f32 %v1416, %v1446
        %v1456 = vadd.f32 %v1417, %v1446
        %v1457 = vadd.f32 %v1418, %v1446
        %v1458 = vadd.f32 %v1419, %v1446
        %v1459 = vadd.f32 %v1420, %v1446
        %v1460 = vadd.f32 %v1421, %v1446
        %v1461 = vadd.f32 %v1422, %v1446
        %v1462 = vadd.f32 %v1423, %v1446
        %v1463 = vadd.f32 %v1424, %v1446
        %v1464 = vadd.f32 %v1425, %v1446
        %v1465 = vadd.f32 %v1426, %v1446
        %v1466 = vadd.f32 %v1427, %v1446
        %v1467 = vadd.f32 %v1428, %v1446
        %v1468 = vadd.f32 %v1429, %v1446
        %v1469 = vadd.f32 %v1430, %v1446
        %v1470 = vadd.f32 %v1431, %v1446
        %v1471 = vadd.f32 %v1432, %v1446
        %v1472 = vadd.f32 %v1433, %v1446
        %v1473 = vadd.f32 %v1434, %v1446
        %v1474 = vadd.f32 %v1435, %v1446
        %v1475 = vadd.f32 %v1436, %v1446
        %v1476 = vadd.f32 %v1437, %v1446
        %v1477 = vadd.f32 %v1438, %v1446
        %v1478 = vadd.f32 %v1439, %v1446
        %v1479 = vadd.f32 %v1440, %v1446
        %v1480 = vmax.f32 %v1448, 0.0
        %v1481 = vmax.f32 %v1449, 0.0
        %v1482 = vmax.f32 %v1450, 0.0
        %v1483 = vmax.f32 %v1451, 0.0
        %v1484 = vmax.f32 %v1452, 0.0
        %v1485 = vmax.f32 %v1453, 0.0
        %v1486 = vmax.f32 %v1454, 0.0
        %v1487 = vmax.f32 %v1455, 0.0
        %v1488 = vmax.f32 %v1456, 0.0
        %v1489 = vmax.f32 %v1457, 0.0
        %v1490 = vmax.f32 %v1458, 0.0
        %v1491 = vmax.f32 %v1459, 0.0
        %v1492 = vmax.f32 %v1460, 0.0
        %v1493 = vmax.f32 %v1461, 0.0
        %v1494 = vmax.f32 %v1462, 0.0
        %v1495 = vmax.f32 %v1463, 0.0
        %v1496 = vmax.f32 %v1464, 0.0
        %v1497 = vmax.f32 %v1465, 0.0
        %v1498 = vmax.f32 %v1466, 0.0
        %v1499 = vmax.f32 %v1467, 0.0
        %v1500 = vmax.f32 %v1468, 0.0
        %v1501 = vmax.f32 %v1469, 0.0
        %v1502 = vmax.f32 %v1470, 0.0
        %v1503 = vmax.f32 %v1471, 0.0
        %v1504 = vmax.f32 %v1472, 0.0
        %v1505 = vmax.f32 %v1473, 0.0
        %v1506 = vmax.f32 %v1474, 0.0
        %v1507 = vmax.f32 %v1475, 0.0
        %v1508 = vmax.f32 %v1476, 0.0
        %v1509 = vmax.f32 %v1477, 0.0
        %v1510 = vmax.f32 %v1478, 0.0
        %v1511 = vmax.f32 %v1479, 0.0
        %v1512 = vpack.c.bf16 %v1481, %v1480
        %v1513 = vpack.c.bf16 %v1483, %v1482
        %v1514 = vpack.c.bf16 %v1485, %v1484
        %v1515 = vpack.c.bf16 %v1487, %v1486
        %v1516 = vpack.c.bf16 %v1489, %v1488
        %v1517 = vpack.c.bf16 %v1491, %v1490
        %v1518 = vpack.c.bf16 %v1493, %v1492
        %v1519 = vpack.c.bf16 %v1495, %v1494
        %v1520 = vpack.c.bf16 %v1497, %v1496
        %v1521 = vpack.c.bf16 %v1499, %v1498
        %v1522 = vpack.c.bf16 %v1501, %v1500
        %v1523 = vpack.c.bf16 %v1503, %v1502
        %v1524 = vpack.c.bf16 %v1505, %v1504
        %v1525 = vpack.c.bf16 %v1507, %v1506
        %v1526 = vpack.c.bf16 %v1509, %v1508
        %v1527 = vpack.c.bf16 %v1511, %v1510
        %v1528 = vld [vmem:[%s6] sm:$0x3]
        %v1529 = vld [vmem:[%s7] sm:$0x1]
        %v1531 = vlaneseq
        %v1532 = vshrl.u32 %v1531, 7
        %v1533 = vsub.s32 0, %v1532
        %v1534 = vrot.slane %v1529, %v1533
        %vm1536 = vcmask 31744
        %v1538 = vsel %vm1536, %v1512, 0
        %v1541 = vsel %vm1536, %v1513, 0
        %v1544 = vsel %vm1536, %v1514, 0
        %v1547 = vsel %vm1536, %v1515, 0
        %v1550 = vsel %vm1536, %v1516, 0
        %v1553 = vsel %vm1536, %v1517, 0
        %v1556 = vsel %vm1536, %v1518, 0
        %v1559 = vsel %vm1536, %v1519, 0
        %v1562 = vsel %vm1536, %v1520, 0
        %v1565 = vsel %vm1536, %v1521, 0
        %v1568 = vsel %vm1536, %v1522, 0
        %v1571 = vsel %vm1536, %v1523, 0
        %v1574 = vsel %vm1536, %v1524, 0
        %v1577 = vsel %vm1536, %v1525, 0
        %v1580 = vsel %vm1536, %v1526, 0
        %v1583 = vsel %vm1536, %v1527, 0
        %vm1585 = vcmask 1041408
        %v1587 = vsel %vm1585, %v1528, 0
        %1589 = vmatprep.subr.bf16.mxu0 0
        %1590 = vmatpush1.bf16.msra.mxu0 %v1587
        %1591 = vmatprep.subr.bf16.mxu0 0
        %1592 = vmatpush1.bf16.msra.mxu0 0
        %1593 = vmatprep.subr.bf16.mxu0 0
        %1594 = vmatpush1.bf16.msra.mxu0 0
        %1595 = vmatprep.subr.bf16.mxu0 0
        %1596 = vmatpush1.bf16.msra.mxu0 0
        %1597 = vmatprep.subr.bf16.mxu0 0
        %1598 = vmatpush1.bf16.msra.mxu0 0
        %1599 = vmatprep.subr.bf16.mxu0 0
        %1600 = vmatpush1.bf16.msra.mxu0 0
        %1601 = vmatprep.subr.bf16.mxu0 0
        %1602 = vmatpush1.bf16.msra.mxu0 0
        %1603 = vmatprep.subr.bf16.mxu0 0
        %1604 = vmatpush1.bf16.msra.mxu0 0
        %1605 = vmatprep.subr.bf16.mxu0 0
        %1606 = vmatpush1.bf16.msra.mxu0 0
        %1607 = vmatprep.subr.bf16.mxu0 0
        %1608 = vmatpush1.bf16.msra.mxu0 0
        %1609 = vmatprep.subr.bf16.mxu0 0
        %1610 = vmatpush1.bf16.msra.mxu0 0
        %1611 = vmatprep.subr.bf16.mxu0 0
        %1612 = vmatpush1.bf16.msra.mxu0 0
        %1613 = vmatprep.subr.bf16.mxu0 0
        %1614 = vmatpush1.bf16.msra.mxu0 0
        %1615 = vmatprep.subr.bf16.mxu0 0
        %1616 = vmatpush1.bf16.msra.mxu0 0
        %1617 = vmatprep.subr.bf16.mxu0 0
        %1618 = vmatpush1.bf16.msra.mxu0 0
        %1619 = vmatprep.subr.bf16.mxu0 0
        %1620 = vmatpush1.bf16.msra.mxu0 0
        %1621 = vmatprep.mubr.bf16.mxu0 0
        %1622 = vmatmul.mubr.bf16.gmra.mrb[0].mxu0 %v1538
        %v1623 = vpop.f32.mrb[0].mxu0
        %v1624 = vadd.f32 %v1534, %v1623
        %v1625 = vpop.f32.mrb[0].mxu0
        %v1626 = vpop.f32.mrb[0].mxu0
        %v1627 = vadd.f32 %v1534, %v1626
        %v1628 = vpop.f32.mrb[0].mxu0
        %1629 = vmatprep.mubr.bf16.mxu0 0
        %1630 = vmatmul.mubr.bf16.gmra.mrb[0].mxu0 %v1541
        %v1631 = vpop.f32.mrb[0].mxu0
        %v1632 = vadd.f32 %v1534, %v1631
        %v1633 = vpop.f32.mrb[0].mxu0
        %v1634 = vpop.f32.mrb[0].mxu0
        %v1635 = vadd.f32 %v1534, %v1634
        %v1636 = vpop.f32.mrb[0].mxu0
        %1637 = vmatprep.mubr.bf16.mxu0 0
        %1638 = vmatmul.mubr.bf16.gmra.mrb[0].mxu0 %v1544
        %v1639 = vpop.f32.mrb[0].mxu0
        %v1640 = vadd.f32 %v1534, %v1639
        %v1641 = vpop.f32.mrb[0].mxu0
        %v1642 = vpop.f32.mrb[0].mxu0
        %v1643 = vadd.f32 %v1534, %v1642
        %v1644 = vpop.f32.mrb[0].mxu0
        %1645 = vmatprep.mubr.bf16.mxu0 0
        %1646 = vmatmul.mubr.bf16.gmra.mrb[0].mxu0 %v1547
        %v1647 = vpop.f32.mrb[0].mxu0
        %v1648 = vadd.f32 %v1534, %v1647
        %v1649 = vpop.f32.mrb[0].mxu0
        %v1650 = vpop.f32.mrb[0].mxu0
        %v1651 = vadd.f32 %v1534, %v1650
        %v1652 = vpop.f32.mrb[0].mxu0
        %1653 = vmatprep.mubr.bf16.mxu0 0
        %1654 = vmatmul.mubr.bf16.gmra.mrb[0].mxu0 %v1550
        %v1655 = vpop.f32.mrb[0].mxu0
        %v1656 = vadd.f32 %v1534, %v1655
        %v1657 = vpop.f32.mrb[0].mxu0
        %v1658 = vpop.f32.mrb[0].mxu0
        %v1659 = vadd.f32 %v1534, %v1658
        %v1660 = vpop.f32.mrb[0].mxu0
        %1661 = vmatprep.mubr.bf16.mxu0 0
        %1662 = vmatmul.mubr.bf16.gmra.mrb[0].mxu0 %v1553
        %v1663 = vpop.f32.mrb[0].mxu0
        %v1664 = vadd.f32 %v1534, %v1663
        %v1665 = vpop.f32.mrb[0].mxu0
        %v1666 = vpop.f32.mrb[0].mxu0
        %v1667 = vadd.f32 %v1534, %v1666
        %v1668 = vpop.f32.mrb[0].mxu0
        %1669 = vmatprep.mubr.bf16.mxu0 0
        %1670 = vmatmul.mubr.bf16.gmra.mrb[0].mxu0 %v1556
        %v1671 = vpop.f32.mrb[0].mxu0
        %v1672 = vadd.f32 %v1534, %v1671
        %v1673 = vpop.f32.mrb[0].mxu0
        %v1674 = vpop.f32.mrb[0].mxu0
        %v1675 = vadd.f32 %v1534, %v1674
        %v1676 = vpop.f32.mrb[0].mxu0
        %1677 = vmatprep.mubr.bf16.mxu0 0
        %1678 = vmatmul.mubr.bf16.gmra.mrb[0].mxu0 %v1559
        %v1679 = vpop.f32.mrb[0].mxu0
        %v1680 = vadd.f32 %v1534, %v1679
        %v1681 = vpop.f32.mrb[0].mxu0
        %v1682 = vpop.f32.mrb[0].mxu0
        %v1683 = vadd.f32 %v1534, %v1682
        %v1684 = vpop.f32.mrb[0].mxu0
        %1685 = vmatprep.mubr.bf16.mxu0 0
        %1686 = vmatmul.mubr.bf16.gmra.mrb[0].mxu0 %v1562
        %v1687 = vpop.f32.mrb[0].mxu0
        %v1688 = vadd.f32 %v1534, %v1687
        %v1689 = vpop.f32.mrb[0].mxu0
        %v1690 = vpop.f32.mrb[0].mxu0
        %v1691 = vadd.f32 %v1534, %v1690
        %v1692 = vpop.f32.mrb[0].mxu0
        %1693 = vmatprep.mubr.bf16.mxu0 0
        %1694 = vmatmul.mubr.bf16.gmra.mrb[0].mxu0 %v1565
        %v1695 = vpop.f32.mrb[0].mxu0
        %v1696 = vadd.f32 %v1534, %v1695
        %v1697 = vpop.f32.mrb[0].mxu0
        %v1698 = vpop.f32.mrb[0].mxu0
        %v1699 = vadd.f32 %v1534, %v1698
        %v1700 = vpop.f32.mrb[0].mxu0
        %1701 = vmatprep.mubr.bf16.mxu0 0
        %1702 = vmatmul.mubr.bf16.gmra.mrb[0].mxu0 %v1568
        %v1703 = vpop.f32.mrb[0].mxu0
        %v1704 = vadd.f32 %v1534, %v1703
        %v1705 = vpop.f32.mrb[0].mxu0
        %v1706 = vpop.f32.mrb[0].mxu0
        %v1707 = vadd.f32 %v1534, %v1706
        %v1708 = vpop.f32.mrb[0].mxu0
        %1709 = vmatprep.mubr.bf16.mxu0 0
        %1710 = vmatmul.mubr.bf16.gmra.mrb[0].mxu0 %v1571
        %v1711 = vpop.f32.mrb[0].mxu0
        %v1712 = vadd.f32 %v1534, %v1711
        %v1713 = vpop.f32.mrb[0].mxu0
        %v1714 = vpop.f32.mrb[0].mxu0
        %v1715 = vadd.f32 %v1534, %v1714
        %v1716 = vpop.f32.mrb[0].mxu0
        %1717 = vmatprep.mubr.bf16.mxu0 0
        %1718 = vmatmul.mubr.bf16.gmra.mrb[0].mxu0 %v1574
        %v1719 = vpop.f32.mrb[0].mxu0
        %v1720 = vadd.f32 %v1534, %v1719
        %v1721 = vpop.f32.mrb[0].mxu0
        %v1722 = vpop.f32.mrb[0].mxu0
        %v1723 = vadd.f32 %v1534, %v1722
        %v1724 = vpop.f32.mrb[0].mxu0
        %1725 = vmatprep.mubr.bf16.mxu0 0
        %1726 = vmatmul.mubr.bf16.gmra.mrb[0].mxu0 %v1577
        %v1727 = vpop.f32.mrb[0].mxu0
        %v1728 = vadd.f32 %v1534, %v1727
        %v1729 = vpop.f32.mrb[0].mxu0
        %v1730 = vpop.f32.mrb[0].mxu0
        %v1731 = vadd.f32 %v1534, %v1730
        %v1732 = vpop.f32.mrb[0].mxu0
        %1733 = vmatprep.mubr.bf16.mxu0 0
        %1734 = vmatmul.mubr.bf16.gmra.mrb[0].mxu0 %v1580
        %v1735 = vpop.f32.mrb[0].mxu0
        %v1736 = vadd.f32 %v1534, %v1735
        %v1737 = vpop.f32.mrb[0].mxu0
        %v1738 = vpop.f32.mrb[0].mxu0
        %v1739 = vadd.f32 %v1534, %v1738
        %v1740 = vpop.f32.mrb[0].mxu0
        %1741 = vmatprep.mubr.bf16.mxu0 0
        %1742 = vmatmul.mubr.bf16.gmra.mrb[0].mxu0 %v1583
        %v1743 = vpop.f32.mrb[0].mxu0
        %v1744 = vadd.f32 %v1534, %v1743
        %v1745 = vpop.f32.mrb[0].mxu0
        %v1746 = vpop.f32.mrb[0].mxu0
        %v1747 = vadd.f32 %v1534, %v1746
        %v1748 = vpop.f32.mrb[0].mxu0
        %1749 = vdwg.mxu0
        %1750 = vxpose.xlu0.b32.start [1/16] %v1624, 128
        %1751 = vxpose.xlu0.b32.cont [2/16] %v1627, 128
        %1752 = vxpose.xlu0.b32.cont [3/16] %v1632, 128
        %1753 = vxpose.xlu0.b32.cont [4/16] %v1635, 128
        %1754 = vxpose.xlu0.b32.cont [5/16] %v1640, 128
        %1755 = vxpose.xlu0.b32.cont [6/16] %v1643, 128
        %1756 = vxpose.xlu0.b32.cont [7/16] %v1648, 128
        %1757 = vxpose.xlu0.b32.cont [8/16] %v1651, 128
        %1758 = vxpose.xlu0.b32.cont [9/16] %v1656, 128
        %1759 = vxpose.xlu0.b32.cont [10/16] %v1659, 128
        %1760 = vxpose.xlu0.b32.cont [11/16] %v1664, 128
        %1761 = vxpose.xlu0.b32.cont [12/16] %v1667, 128
        %1762 = vxpose.xlu0.b32.cont [13/16] %v1672, 128
        %1763 = vxpose.xlu0.b32.cont [14/16] %v1675, 128
        %1764 = vxpose.xlu0.b32.cont [15/16] %v1680, 128
        %1765 = vxpose.xlu0.b32.end [16/16] %v1683, 128
        %v1766 = vpop.trf.xlu0
        %v1767 = vpop.trf.xlu0
        %v1768 = vpop.trf.xlu0
        %v1769 = vpop.trf.xlu0
        %v1770 = vpop.trf.xlu0
        %v1771 = vpop.trf.xlu0
        %v1772 = vpop.trf.xlu0
        %v1773 = vpop.trf.xlu0
        %v1774 = vpop.trf.xlu0
        %v1775 = vpop.trf.xlu0
        %v1776 = vpop.trf.xlu0
        %v1777 = vpop.trf.xlu0
        %v1778 = vpop.trf.xlu0
        %v1779 = vpop.trf.xlu0
        %v1780 = vpop.trf.xlu0
        %v1781 = vpop.trf.xlu0
        %1782 = vxpose.xlu0.b32.start [1/16] %v1688, 128
        %1783 = vxpose.xlu0.b32.cont [2/16] %v1691, 128
        %1784 = vxpose.xlu0.b32.cont [3/16] %v1696, 128
        %1785 = vxpose.xlu0.b32.cont [4/16] %v1699, 128
        %1786 = vxpose.xlu0.b32.cont [5/16] %v1704, 128
        %1787 = vxpose.xlu0.b32.cont [6/16] %v1707, 128
        %1788 = vxpose.xlu0.b32.cont [7/16] %v1712, 128
        %1789 = vxpose.xlu0.b32.cont [8/16] %v1715, 128
        %1790 = vxpose.xlu0.b32.cont [9/16] %v1720, 128
        %1791 = vxpose.xlu0.b32.cont [10/16] %v1723, 128
        %1792 = vxpose.xlu0.b32.cont [11/16] %v1728, 128
        %1793 = vxpose.xlu0.b32.cont [12/16] %v1731, 128
        %1794 = vxpose.xlu0.b32.cont [13/16] %v1736, 128
        %1795 = vxpose.xlu0.b32.cont [14/16] %v1739, 128
        %1796 = vxpose.xlu0.b32.cont [15/16] %v1744, 128
        %1797 = vxpose.xlu0.b32.end [16/16] %v1747, 128
        %v1798 = vpop.trf.xlu0
        %v1799 = vpop.trf.xlu0
        %v1800 = vpop.trf.xlu0
        %v1801 = vpop.trf.xlu0
        %v1802 = vpop.trf.xlu0
        %v1803 = vpop.trf.xlu0
        %v1804 = vpop.trf.xlu0
        %v1805 = vpop.trf.xlu0
        %v1806 = vpop.trf.xlu0
        %v1807 = vpop.trf.xlu0
        %v1808 = vpop.trf.xlu0
        %v1809 = vpop.trf.xlu0
        %v1810 = vpop.trf.xlu0
        %v1811 = vpop.trf.xlu0
        %v1812 = vpop.trf.xlu0
        %v1813 = vpop.trf.xlu0
        %1814 = vst [vmem:[%s421] sm:$0xff] %v1766
        %1815 = vst [vmem:[%s421 + $0x8] sm:$0xff] %v1798
        %s1816 = sand.u32 %s249, 1
        %s1817 = scalar_lea.sflag [#allocation3], %s1816
        %s1818 = sand.u32 %s249, 1
        %s1819 = smul.addr %s1818, 16
        %s1820 = scalar_lea.vmem [#allocation2], %s1819
        // Predicated region
        $region53: #{tpu_custom_call.1} parent=51 // pred_check
          %p1821 = pneg %p259
        $region54: #{tpu_custom_call.1} parent=51 // pred_check_branch
          %1823 = sbr.rel (%p1821) target = $region56
        $region55: #{tpu_custom_call.1} parent=51 // pred_region
          %s1824 = smul.u32 2, %s27
          %s1826 = ssub.s32 256, 256
          %1827 = vsyncadd %s1817, %s1826
          %s1828 = smul.addr %s26, 2
          %s1829 = sadd.s32 %s1824, %s1828
          %s1830 = smul.addr %s1829, 128
          %s1831 = scalar_lea.hbm %s8, %s1830
          %s1833 = sshll.u32 %s1820, 4
          %s1834 = int_to_ptr.vmem [resolvable:$true] %s1833
          %1836 = dma.vmem_to_hbm [thread:$0]  %s1834, 256, %s1831, %s1817
        $region56: #{tpu_custom_call.1} parent=51 // pred_fallthru
          _
      $region52: #{tpu_custom_call.1} parent=5 // pred_fallthru
        _
      %p1837 = scmp.le.s32.totalorder 2, %s17
      // Predicated region
      $region57: #{tpu_custom_call.1} parent=5 // pred_check
        %p1838 = pneg %p1837
      $region58: #{tpu_custom_call.1} parent=5 // pred_check_branch
        %1840 = sbr.rel (%p1838) target = $region60
      $region59: #{tpu_custom_call.1} parent=5 // pred_region
        %s1841 = ssub.s32 %s17, 2
        // Predicated region
        $region61: #{tpu_custom_call.1} parent=59 // pred_check
          %p1842 = pneg %p265
        $region62: #{tpu_custom_call.1} parent=59 // pred_check_branch
          %1844 = sbr.rel (%p1842) target = $region64
        $region63: #{tpu_custom_call.1} parent=59 // pred_region
          %s1845 = sand.u32 %s250, 1
          %s1846 = scalar_lea.sflag [#allocation3], %s1845
          %s1847 = sand.u32 %s250, 1
          %s1848 = smul.addr %s1847, 16
          %s1849 = scalar_lea.vmem [#allocation2], %s1848
          %1850 = dma.done %s1846, 256
        $region64: #{tpu_custom_call.1} parent=59 // pred_fallthru
          _
      $region60: #{tpu_custom_call.1} parent=5 // pred_fallthru
        _
    $region6: #{tpu_custom_call.1} parent=1 // loop_footer
      %s21 = sadd.s32 1, %s17
    $region7: #{tpu_custom_call.1} parent=1 // loop_footer_branch
      %16 = sbr.rel target = $region3
    $region8: #{tpu_custom_call.1} parent=1 // loop_exit
      _
    %1851 = vsyncpa [#allocation3], 1
    %s1852 = scalar_lea.sflag [#allocation3], 1
    %1853 = vsyncpa %s1852, 1

</llo_original>
